<compile_context>
chip_gen: v6e
topology: v6e:2x2x1
jax: 0.10.0
libtpu: 0.0.40
codegen_flags: <defaults>
</compile_context>

<pallas_src>
import math

import jax
import jax.numpy as jnp
from jax import lax
from jax.experimental import pallas as pl
from jax.experimental.pallas import tpu as pltpu


NEG_INF = -1.0e12   # plain Python floats -> inlined literals, not captured consts
BIG = 1.0e12


# ----------------------------------------------------------------------------
# Pallas kernel.  grid = (batch, row_tile), both axes "parallel"
# ----------------------------------------------------------------------------
def _biaffine2_kernel(s_ref,      # (1, TP, H)   compute dtype : start proj (row tile)
                      et_ref,     # (1, Hp, Lp)  compute dtype : end proj, transposed+padded
                      row_ref,    # (1, TP, O)   f32 : s.u + e.w2_e + c  (row tile)
                      col_ref,    # (1, O, Lp)   f32 : e.v + s.w2_s      (columns)
                      mrow_ref,   # (1, Lp, 1)   f32 : full row mask (sliced in-kernel)
                      mcol_ref,   # (1, 1, Lp)   f32 : column mask
                      a_ref,      # (H, O*Hp)    compute dtype : bilinear core (padded)
                      out_ref):   # (1, O, TP, Lp) out dtype
    pt = pl.program_id(1)
    O = out_ref.shape[1]
    TP = out_ref.shape[2]
    Lp = out_ref.shape[3]
    Hp = et_ref.shape[1]

    row0 = pl.multiple_of(pt * TP, TP)

    s_tile = s_ref[0]                                              # (TP, H)
    e_t = et_ref[0]                                                # (Hp, Lp)

    # ---- fused bilinear "left" matmul for ALL output channels ----------------
    t_all = jnp.dot(s_tile, a_ref[...],
                    preferred_element_type=jnp.float32).astype(e_t.dtype)  # (TP, O*Hp)

    rowterm = row_ref[0]                                           # (TP, O) f32
    colterm = col_ref[0]                                           # (O, Lp) f32

    # ---- masking epilogue, hoisted out of the per-channel loop ---------------
    mrow = mrow_ref[0, pl.ds(row0, TP), :]                         # (TP, 1)
    mcol = mcol_ref[0]                                             # (1, Lp)
    mult = mrow * mcol                                             # (TP, Lp)
    rid = lax.broadcasted_iota(jnp.int32, (TP, Lp), 0) + row0
    cid = lax.broadcasted_iota(jnp.int32, (TP, Lp), 1)
    tril = (rid > cid).astype(jnp.float32)                         # strictly lower
    add_term = NEG_INF * ((1.0 - mrow) * mcol + (1.0 - mcol)) - tril * BIG

    # out_size is small & static -> unrolled; each head stores immediately.
    # (For O >> 8, switch to lax.fori_loop / a third grid axis to bound temps.)
    for o in range(O):
        t_o = t_all[:, o * Hp:(o + 1) * Hp]                        # lane-aligned (TP, Hp)
        l1 = jnp.dot(t_o, e_t, preferred_element_type=jnp.float32)  # (TP, Lp)
        lo = l1 + rowterm[:, o:o + 1] + colterm[o:o + 1, :]
        out_ref[0, o] = (lo * mult + add_term).astype(out_ref.dtype)


# ----------------------------------------------------------------------------
# Wrapper: projections, weight re-layout, padding, VMEM budgeting, pallas_call
# ----------------------------------------------------------------------------
def _round_up(x, m):
    return ((x + m - 1) // m) * m


def _vmem_capacity_bytes():
    try:
        info = pltpu.get_tpu_info()
        cap = getattr(info, "vmem_capacity_bytes", None)
        if cap:
            return int(cap)
    except Exception:
        pass
    return 64 * 1024 * 1024   # conservative (v7x per-TC); v5e/v6e have 128 MiB


def biaffine2_forward(inputs, mask, params, *, ab_position=False, use_bf16=True,
                      out_dtype=jnp.float32, return_padded=False):
    """inputs: (B, L, D) f32, mask: (B, L) -> (B, O, L, L) out_dtype.

    return_padded=True returns the (B, O, Lp, Lp) padded/masked tensor and skips
    the post-call slice copy (padded cells carry the -1e12 mask value).
    """
    inputs = inputs.astype(jnp.float32)
    B, L, D = inputs.shape
    if mask is None:
        mask = jnp.ones((B, L), jnp.float32)
    mask = mask.astype(jnp.float32)

    ws, bs, we, be, w1, w2 = (params["ws"], params["bs"], params["we"],
                              params["be"], params["w1"], params["w2"])
    H = ws.shape[1]
    O = w1.shape[1]
    assert w1.shape == (H + 1, O, H + 1), "in_size must equal dim_hid"
    assert w2.shape == (2 * H + 3, O)

    if ab_position:
        inputs = inputs + _sinusoidal_position_embedding(B, L, D)

    Lp = _round_up(L, 128)      # lane-dense output stores
    Hp = _round_up(H, 128)      # lane-aligned per-head slices of t_all
    pad = Lp - L

    # ---- projections + rank-1 terms in the wrapper (f32, tiny vs O(L^2)) ----
    s = jax.nn.relu(inputs @ ws + bs)                              # (B, L, H)
    e = jax.nn.relu(inputs @ we + be)                              # (B, L, H)

    u = w1[:H, :, H]                                               # (H, O)
    v_t = w1[H, :, :H]                                             # (O, H)
    w2_s = w2[:H]                                                  # (H, O)
    w2_e = w2[H + 1:2 * H + 1]                                     # (H, O)
    c_all = w1[H, :, H] + w2[H] + w2[2 * H + 1] + w2[2 * H + 2]    # (O,)

    hp = lax.Precision.HIGHEST
    rowterm = (jnp.einsum("bph,ho->bpo", s, u, precision=hp)
               + jnp.einsum("bph,ho->bpo", e, w2_e, precision=hp)
               + c_all)                                            # (B, L, O)
    colterm = (jnp.einsum("bqh,oh->boq", e, v_t, precision=hp)
               + jnp.einsum("bqh,ho->boq", s, w2_s, precision=hp)) # (B, O, L)

    cdt = jnp.bfloat16 if use_bf16 else jnp.float32                # MXU input dtype

    s_p = jnp.pad(s, ((0, 0), (0, pad), (0, 0))).astype(cdt)                   # (B, Lp, H)
    e_t = jnp.pad(jnp.transpose(e, (0, 2, 1)),
                  ((0, 0), (0, Hp - H), (0, pad))).astype(cdt)                 # (B, Hp, Lp)
    rowterm_p = jnp.pad(rowterm, ((0, 0), (0, pad), (0, 0))).astype(jnp.float32)
    colterm_p = jnp.pad(colterm, ((0, 0), (0, 0), (0, pad))).astype(jnp.float32)
    mask_p = jnp.pad(mask, ((0, 0), (0, pad)))
    mrow = mask_p.reshape(B, Lp, 1)
    mcol = mask_p.reshape(B, 1, Lp)

    a_flat = jnp.pad(w1[:H, :, :H],
                     ((0, 0), (0, 0), (0, Hp - H))).reshape(H, O * Hp).astype(cdt)

    # ---- tile selection & explicit VMEM budgeting (v5e 16 MiB scoped default,
    #      v7x 64 MiB physical, v6e 128 MiB) ----------------------------------
    isz = jnp.dtype(cdt).itemsize
    osz = jnp.dtype(out_dtype).itemsize
    vmem_cap = _vmem_capacity_bytes()
    budget = int(0.65 * vmem_cap)

    def tile_bytes(tp):
        b = 0
        b += 2 * tp * H * isz            # s block (double-buffered)
        b += 2 * Hp * Lp * isz           # e^T block
        b += 2 * tp * O * 4              # rowterm block
        b += 2 * O * Lp * 4              # colterm block
        b += 2 * 2 * Lp * 4              # masks
        b += 2 * H * O * Hp * isz        # a_flat
        b += 2 * O * tp * Lp * osz       # output block (double-buffered)
        b += tp * O * Hp * isz           # t_all temporary
        b += 6 * tp * Lp * 4             # mult / add_term / l1 / lo temporaries
        return b

    TP = 128
    for cand in (512, 256, 128):
        if Lp % cand == 0 and tile_bytes(cand) <= budget:
            TP = cand
            break
    n_pt = Lp // TP

    vmem_limit = int(min(vmem_cap - (8 << 20),
                         max(int(1.25 * tile_bytes(TP)), 32 << 20)))

    flops = int(B * (2 * Lp * H * O * Hp + 2 * O * Lp * Lp * Hp))
    bytes_acc = int(B * (Lp * H * isz + Hp * Lp * isz + 2 * O * Lp * 4
                         + 2 * Lp * 4 + O * Lp * Lp * osz)
                    + H * O * Hp * isz)

    out_p = pl.pallas_call(
        _biaffine2_kernel,
        out_shape=jax.ShapeDtypeStruct((B, O, Lp, Lp), out_dtype),
        grid=(B, n_pt),
        in_specs=[
            pl.BlockSpec((1, TP, H), lambda b, p: (b, p, 0)),       # s (row tile)
            pl.BlockSpec((1, Hp, Lp), lambda b, p: (b, 0, 0)),      # e^T (per batch)
            pl.BlockSpec((1, TP, O), lambda b, p: (b, p, 0)),       # rowterm tile
            pl.BlockSpec((1, O, Lp), lambda b, p: (b, 0, 0)),       # colterm
            pl.BlockSpec((1, Lp, 1), lambda b, p: (b, 0, 0)),       # row mask (full)
            pl.BlockSpec((1, 1, Lp), lambda b, p: (b, 0, 0)),       # col mask
            pl.BlockSpec((H, O * Hp), lambda b, p: (0, 0)),         # a_flat (const)
        ],
        out_specs=pl.BlockSpec((1, O, TP, Lp), lambda b, p: (b, 0, p, 0)),
        compiler_params=pltpu.CompilerParams(
            dimension_semantics=("parallel", "parallel"),
            vmem_limit_bytes=vmem_limit),
        cost_estimate=pl.CostEstimate(flops=flops, transcendentals=0,
                                      bytes_accessed=bytes_acc),
    )(s_p, e_t, rowterm_p, colterm_p, mrow, mcol, a_flat)

    if return_padded or pad == 0:
        return out_p
    return out_p[:, :, :L, :L]


def _sinusoidal_position_embedding(batch, seq_len, output_dim):
    # SinusoidalPositionEmbedding(output_dim, 'add')
    pos = jnp.arange(seq_len, dtype=jnp.float32)[None]              # (1, L)
    idx = jnp.arange(output_dim // 2, dtype=jnp.float32)
    idx = jnp.power(10000.0, -2.0 * idx / output_dim)
    emb = jnp.einsum("bn,d->bnd", pos, idx)
    emb = jnp.stack([jnp.sin(emb), jnp.cos(emb)], axis=-1)
    emb = emb.reshape(-1, seq_len, output_dim)
    return jnp.broadcast_to(emb, (batch, seq_len, output_dim))


# ----------------------------------------------------------------------------
# Deterministic parameter initialization (synthetic, mirrors shapes in __init__)
# ----------------------------------------------------------------------------
def init_params(key, in_size, out_size, dim_in, dim_hid):
    ks = jax.random.split(key, 6)

    def kaiming_uniform(k, shape, fan_in):
        bound = math.sqrt(6.0 / ((1.0 + 5.0) * fan_in))  # a = sqrt(5)
        return jax.random.uniform(k, shape, jnp.float32, -bound, bound)

    ws = kaiming_uniform(ks[0], (dim_in, dim_hid), dim_in)
    bs = jax.random.uniform(ks[1], (dim_hid,), jnp.float32,
                            -1.0 / math.sqrt(dim_in), 1.0 / math.sqrt(dim_in))
    we = kaiming_uniform(ks[2], (dim_in, dim_hid), dim_in)
    be = jax.random.uniform(ks[3], (dim_hid,), jnp.float32,
                            -1.0 / math.sqrt(dim_in), 1.0 / math.sqrt(dim_in))
    w1 = kaiming_uniform(ks[4], (in_size + 1, out_size, in_size + 1),
                         out_size * (in_size + 1))
    w2 = kaiming_uniform(ks[5], (2 * in_size + 3, out_size), out_size)
    return {"ws": ws, "bs": bs, "we": we, "be": be, "w1": w1, "w2": w2}


# ----------------------------------------------------------------------------
# Pure-JAX reference (mirrors the PyTorch forward exactly) for verification
# ----------------------------------------------------------------------------
def biaffine2_reference(inputs, mask, params):
    ws, bs, we, be, w1, w2 = (params["ws"], params["bs"], params["we"],
                              params["be"], params["w1"], params["w2"])
    B, L, _ = inputs.shape
    s = jax.nn.relu(inputs @ ws + bs)
    e = jax.nn.relu(inputs @ we + be)
    ones = jnp.ones_like(s[..., :1])
    s1 = jnp.concatenate([s, ones], axis=-1)
    e1 = jnp.concatenate([e, ones], axis=-1)
    hp1 = s1.shape[-1]
    start_con = jnp.broadcast_to(s1[:, None, :, :], (B, L, L, hp1))
    end_con = jnp.broadcast_to(e1[:, :, None, :], (B, L, L, hp1))
    cat = jnp.concatenate(
        [start_con, end_con, jnp.ones((B, L, L, 1), jnp.float32)], axis=-1)
    logits1 = jnp.einsum("bxi,ioj,byj->bxyo", s1, w1, e1)
    logits2 = jnp.einsum("bijy,yo->bijo", cat, w2)
    logits = logits1 + logits2
    logits = jnp.transpose(logits, (0, 3, 1, 2))
    # add_mask_tril
    m = mask.astype(logits.dtype)
    mrow = m[:, None, :, None]
    mcol = m[:, None, None, :]
    logits = logits * mrow + (-1.0e12) * (1.0 - mrow)
    logits = logits * mcol + (-1.0e12) * (1.0 - mcol)
    tril = jnp.tril(jnp.ones((L, L), logits.dtype), -1)
    logits = logits - tril * 1.0e12
    return logits


if __name__ == "__main__":
    # small shapes consistent with the module
    B, L = 2, 8
    dim_in = 32
    dim_hid = 32          # in_size must equal dim_hid for the biaffine weights
    in_size = dim_hid
    out_size = 4

    key = jax.random.PRNGKey(0)
    k_x, k_p = jax.random.split(key)
    x = jax.random.normal(k_x, (B, L, dim_in), jnp.float32)
    # mask: batch 0 fully valid, batch 1 has the last two positions padded
    mask = jnp.ones((B, L), jnp.float32)
    mask = mask.at[1, L - 2:].set(0.0)

    params = init_params(k_p, in_size, out_size, dim_in, dim_hid)
    ref = biaffine2_reference(x, mask, params)

    # exact path (f32 MXU inputs): tight tolerance vs. the f32 reference
    out_f32 = jax.block_until_ready(
        biaffine2_forward(x, mask, params, use_bf16=False))
    assert out_f32.shape == (B, out_size, L, L), out_f32.shape
    assert jnp.allclose(out_f32, ref, rtol=1e-4, atol=2e-3), (
        float(jnp.max(jnp.abs(out_f32 - ref))))

    # fast path (bf16 MXU inputs, f32 accumulate): loose tolerance vs f32 ref
    out_bf16 = jax.block_until_ready(
        biaffine2_forward(x, mask, params, use_bf16=True))
    assert out_bf16.shape == (B, out_size, L, L), out_bf16.shape
    assert jnp.allclose(out_bf16, ref, rtol=1e-1, atol=1e-1), (
        float(jnp.max(jnp.abs(out_bf16 - ref))))

    # bf16-output mode (halves the dominant O(L^2) HBM write): loose check
    out_bf16o = jax.block_until_ready(
        biaffine2_forward(x, mask, params, use_bf16=True,
                          out_dtype=jnp.bfloat16))
    assert out_bf16o.shape == (B, out_size, L, L), out_bf16o.shape
    assert jnp.allclose(out_bf16o.astype(jnp.float32), ref,
                        rtol=2e-1, atol=2e-1), (
        float(jnp.max(jnp.abs(out_bf16o.astype(jnp.float32) - ref))))

    print("KERNEL_OK")
</pallas_src>

<mosaic_0001>
module attributes {stable_mosaic.version = 11 : i64} {
  func.func @_biaffine2_kernel(%arg0: i32, %arg1: i32, %arg2: memref<1x128x32xf32, #tpu.memory_space<vmem>>, %arg3: memref<1x128x128xf32, #tpu.memory_space<vmem>>, %arg4: memref<1x128x4xf32, #tpu.memory_space<vmem>>, %arg5: memref<1x4x128xf32, #tpu.memory_space<vmem>>, %arg6: memref<1x128x1xf32, #tpu.memory_space<vmem>>, %arg7: memref<1x1x128xf32, #tpu.memory_space<vmem>>, %arg8: memref<32x512xf32, #tpu.memory_space<vmem>>, %arg9: memref<1x4x128x128xf32, #tpu.memory_space<vmem>>) attributes {dimension_semantics = [#tpu.dimension_semantics<parallel>, #tpu.dimension_semantics<parallel>], iteration_bounds = array<i64: 2, 1>, scalar_prefetch = 0 : i64, scratch_operands = 0 : i64, tpu.core_type = #tpu.core_type<tc>, window_params = [{transform_indices = @transform_0, window_bounds = array<i64: 1, 128, 32>}, {transform_indices = @transform_1, window_bounds = array<i64: 1, 128, 128>}, {transform_indices = @transform_2, window_bounds = array<i64: 1, 128, 4>}, {transform_indices = @transform_3, window_bounds = array<i64: 1, 4, 128>}, {transform_indices = @transform_4, window_bounds = array<i64: 1, 128, 1>}, {transform_indices = @transform_5, window_bounds = array<i64: 1, 1, 128>}, {pipeline_mode = #tpu.pipeline_mode<synchronous>, transform_indices = @transform_6, window_bounds = array<i64: 32, 512>}, {transform_indices = @transform_7, window_bounds = array<i64: 1, 4, 128, 128>}]} {
    %c128_i32 = arith.constant 128 : i32
    %0 = arith.muli %arg1, %c128_i32 : i32
    %1 = tpu.assume_multiple %0, 128 : i32
    %c0 = arith.constant 0 : index
    %c0_0 = arith.constant 0 : index
    %c0_1 = arith.constant 0 : index
    %2 = vector.load %arg2[%c0, %c0_0, %c0_1] : memref<1x128x32xf32, #tpu.memory_space<vmem>>, vector<1x128x32xf32>
    %3 = vector.shape_cast %2 : vector<1x128x32xf32> to vector<128x32xf32>
    %c0_2 = arith.constant 0 : index
    %c0_3 = arith.constant 0 : index
    %c0_4 = arith.constant 0 : index
    %4 = vector.load %arg3[%c0_2, %c0_3, %c0_4] : memref<1x128x128xf32, #tpu.memory_space<vmem>>, vector<1x128x128xf32>
    %5 = vector.shape_cast %4 : vector<1x128x128xf32> to vector<128x128xf32>
    %c0_5 = arith.constant 0 : index
    %c0_6 = arith.constant 0 : index
    %6 = vector.load %arg8[%c0_5, %c0_6] : memref<32x512xf32, #tpu.memory_space<vmem>>, vector<32x512xf32>
    %cst = arith.constant dense<0.000000e+00> : vector<128x512xf32>
    %7 = tpu.matmul %3, %6, %cst {dimension_numbers = #tpu.dot_dimension_numbers<[1], [0], [0], [1], [0, 0, 1, 1], [], []>} : vector<128x32xf32>, vector<32x512xf32>, vector<128x512xf32> -> vector<128x512xf32>
    %c0_7 = arith.constant 0 : index
    %c0_8 = arith.constant 0 : index
    %c0_9 = arith.constant 0 : index
    %8 = vector.load %arg4[%c0_7, %c0_8, %c0_9] : memref<1x128x4xf32, #tpu.memory_space<vmem>>, vector<1x128x4xf32>
    %9 = vector.shape_cast %8 : vector<1x128x4xf32> to vector<128x4xf32>
    %c0_10 = arith.constant 0 : index
    %c0_11 = arith.constant 0 : index
    %c0_12 = arith.constant 0 : index
    %10 = vector.load %arg5[%c0_10, %c0_11, %c0_12] : memref<1x4x128xf32, #tpu.memory_space<vmem>>, vector<1x4x128xf32>
    %11 = vector.shape_cast %10 : vector<1x4x128xf32> to vector<4x128xf32>
    %c0_13 = arith.constant 0 : index
    %12 = arith.index_cast %1 : i32 to index
    %c0_14 = arith.constant 0 : index
    %13 = vector.load %arg6[%c0_13, %12, %c0_14] : memref<1x128x1xf32, #tpu.memory_space<vmem>>, vector<1x128x1xf32>
    %14 = vector.shape_cast %13 : vector<1x128x1xf32> to vector<128x1xf32>
    %c0_15 = arith.constant 0 : index
    %c0_16 = arith.constant 0 : index
    %c0_17 = arith.constant 0 : index
    %15 = vector.load %arg7[%c0_15, %c0_16, %c0_17] : memref<1x1x128xf32, #tpu.memory_space<vmem>>, vector<1x1x128xf32>
    %16 = vector.shape_cast %15 : vector<1x1x128xf32> to vector<1x128xf32>
    %17 = vector.broadcast %14 : vector<128x1xf32> to vector<128x128xf32>
    %18 = vector.broadcast %16 : vector<1x128xf32> to vector<128x128xf32>
    %19 = arith.mulf %17, %18 : vector<128x128xf32>
    %20 = tpu.iota {dimensions = array<i32: 0>} : vector<128x128xi32>
    %21 = vector.broadcast %1 : i32 to vector<128x128xi32>
    %22 = arith.addi %20, %21 : vector<128x128xi32>
    %23 = tpu.iota {dimensions = array<i32: 1>} : vector<128x128xi32>
    %24 = arith.cmpi sgt, %22, %23 : vector<128x128xi32>
    %25 = arith.extui %24 : vector<128x128xi1> to vector<128x128xi32>
    %26 = arith.sitofp %25 : vector<128x128xi32> to vector<128x128xf32>
    %cst_18 = arith.constant 1.000000e+00 : f32
    %27 = vector.broadcast %cst_18 : f32 to vector<128x1xf32>
    %28 = arith.subf %27, %14 : vector<128x1xf32>
    %29 = vector.broadcast %28 : vector<128x1xf32> to vector<128x128xf32>
    %30 = vector.broadcast %16 : vector<1x128xf32> to vector<128x128xf32>
    %31 = arith.mulf %29, %30 : vector<128x128xf32>
    %cst_19 = arith.constant 1.000000e+00 : f32
    %32 = vector.broadcast %cst_19 : f32 to vector<1x128xf32>
    %33 = arith.subf %32, %16 : vector<1x128xf32>
    %34 = vector.broadcast %33 : vector<1x128xf32> to vector<128x128xf32>
    %35 = arith.addf %31, %34 : vector<128x128xf32>
    %cst_20 = arith.constant -9.99999995E+11 : f32
    %36 = vector.broadcast %cst_20 : f32 to vector<128x128xf32>
    %37 = arith.mulf %36, %35 : vector<128x128xf32>
    %cst_21 = arith.constant 9.99999995E+11 : f32
    %38 = vector.broadcast %cst_21 : f32 to vector<128x128xf32>
    %39 = arith.mulf %26, %38 : vector<128x128xf32>
    %40 = arith.subf %37, %39 : vector<128x128xf32>
    %41 = vector.extract_strided_slice %7 {offsets = [0, 0], sizes = [128, 128], strides = [1, 1]} : vector<128x512xf32> to vector<128x128xf32>
    %cst_22 = arith.constant dense<0.000000e+00> : vector<128x128xf32>
    %42 = tpu.matmul %41, %5, %cst_22 {dimension_numbers = #tpu.dot_dimension_numbers<[1], [0], [0], [1], [0, 0, 1, 1], [], []>} : vector<128x128xf32>, vector<128x128xf32>, vector<128x128xf32> -> vector<128x128xf32>
    %43 = vector.extract_strided_slice %9 {offsets = [0, 0], sizes = [128, 1], strides = [1, 1]} : vector<128x4xf32> to vector<128x1xf32>
    %44 = vector.broadcast %43 : vector<128x1xf32> to vector<128x128xf32>
    %45 = arith.addf %42, %44 : vector<128x128xf32>
    %46 = vector.extract_strided_slice %11 {offsets = [0, 0], sizes = [1, 128], strides = [1, 1]} : vector<4x128xf32> to vector<1x128xf32>
    %47 = vector.broadcast %46 : vector<1x128xf32> to vector<128x128xf32>
    %48 = arith.addf %45, %47 : vector<128x128xf32>
    %49 = arith.mulf %48, %19 : vector<128x128xf32>
    %50 = arith.addf %49, %40 : vector<128x128xf32>
    %c0_23 = arith.constant 0 : index
    %c0_24 = arith.constant 0 : index
    %c0_25 = arith.constant 0 : index
    %c0_26 = arith.constant 0 : index
    %51 = vector.load %arg9[%c0_23, %c0_24, %c0_25, %c0_26] : memref<1x4x128x128xf32, #tpu.memory_space<vmem>>, vector<1x1x128x128xf32>
    %52 = vector.shape_cast %51 : vector<1x1x128x128xf32> to vector<128x128xf32>
    %53 = vector.shape_cast %50 : vector<128x128xf32> to vector<1x1x128x128xf32>
    tpu.vector_store %arg9[%c0_23, %c0_24, %c0_25, %c0_26], %53 {strides = array<i32>} : memref<1x4x128x128xf32, #tpu.memory_space<vmem>>, vector<1x1x128x128xf32>,
    %54 = vector.extract_strided_slice %7 {offsets = [0, 128], sizes = [128, 128], strides = [1, 1]} : vector<128x512xf32> to vector<128x128xf32>
    %cst_27 = arith.constant dense<0.000000e+00> : vector<128x128xf32>
    %55 = tpu.matmul %54, %5, %cst_27 {dimension_numbers = #tpu.dot_dimension_numbers<[1], [0], [0], [1], [0, 0, 1, 1], [], []>} : vector<128x128xf32>, vector<128x128xf32>, vector<128x128xf32> -> vector<128x128xf32>
    %56 = vector.extract_strided_slice %9 {offsets = [0, 1], sizes = [128, 1], strides = [1, 1]} : vector<128x4xf32> to vector<128x1xf32>
    %57 = vector.broadcast %56 : vector<128x1xf32> to vector<128x128xf32>
    %58 = arith.addf %55, %57 : vector<128x128xf32>
    %59 = vector.extract_strided_slice %11 {offsets = [1, 0], sizes = [1, 128], strides = [1, 1]} : vector<4x128xf32> to vector<1x128xf32>
    %60 = vector.broadcast %59 : vector<1x128xf32> to vector<128x128xf32>
    %61 = arith.addf %58, %60 : vector<128x128xf32>
    %62 = arith.mulf %61, %19 : vector<128x128xf32>
    %63 = arith.addf %62, %40 : vector<128x128xf32>
    %c0_28 = arith.constant 0 : index
    %c1 = arith.constant 1 : index
    %c0_29 = arith.constant 0 : index
    %c0_30 = arith.constant 0 : index
    %64 = vector.load %arg9[%c0_28, %c1, %c0_29, %c0_30] : memref<1x4x128x128xf32, #tpu.memory_space<vmem>>, vector<1x1x128x128xf32>
    %65 = vector.shape_cast %64 : vector<1x1x128x128xf32> to vector<128x128xf32>
    %66 = vector.shape_cast %63 : vector<128x128xf32> to vector<1x1x128x128xf32>
    tpu.vector_store %arg9[%c0_28, %c1, %c0_29, %c0_30], %66 {strides = array<i32>} : memref<1x4x128x128xf32, #tpu.memory_space<vmem>>, vector<1x1x128x128xf32>,
    %67 = vector.extract_strided_slice %7 {offsets = [0, 256], sizes = [128, 128], strides = [1, 1]} : vector<128x512xf32> to vector<128x128xf32>
    %cst_31 = arith.constant dense<0.000000e+00> : vector<128x128xf32>
    %68 = tpu.matmul %67, %5, %cst_31 {dimension_numbers = #tpu.dot_dimension_numbers<[1], [0], [0], [1], [0, 0, 1, 1], [], []>} : vector<128x128xf32>, vector<128x128xf32>, vector<128x128xf32> -> vector<128x128xf32>
    %69 = vector.extract_strided_slice %9 {offsets = [0, 2], sizes = [128, 1], strides = [1, 1]} : vector<128x4xf32> to vector<128x1xf32>
    %70 = vector.broadcast %69 : vector<128x1xf32> to vector<128x128xf32>
    %71 = arith.addf %68, %70 : vector<128x128xf32>
    %72 = vector.extract_strided_slice %11 {offsets = [2, 0], sizes = [1, 128], strides = [1, 1]} : vector<4x128xf32> to vector<1x128xf32>
    %73 = vector.broadcast %72 : vector<1x128xf32> to vector<128x128xf32>
    %74 = arith.addf %71, %73 : vector<128x128xf32>
    %75 = arith.mulf %74, %19 : vector<128x128xf32>
    %76 = arith.addf %75, %40 : vector<128x128xf32>
    %c0_32 = arith.constant 0 : index
    %c2 = arith.constant 2 : index
    %c0_33 = arith.constant 0 : index
    %c0_34 = arith.constant 0 : index
    %77 = vector.load %arg9[%c0_32, %c2, %c0_33, %c0_34] : memref<1x4x128x128xf32, #tpu.memory_space<vmem>>, vector<1x1x128x128xf32>
    %78 = vector.shape_cast %77 : vector<1x1x128x128xf32> to vector<128x128xf32>
    %79 = vector.shape_cast %76 : vector<128x128xf32> to vector<1x1x128x128xf32>
    tpu.vector_store %arg9[%c0_32, %c2, %c0_33, %c0_34], %79 {strides = array<i32>} : memref<1x4x128x128xf32, #tpu.memory_space<vmem>>, vector<1x1x128x128xf32>,
    %80 = vector.extract_strided_slice %7 {offsets = [0, 384], sizes = [128, 128], strides = [1, 1]} : vector<128x512xf32> to vector<128x128xf32>
    %cst_35 = arith.constant dense<0.000000e+00> : vector<128x128xf32>
    %81 = tpu.matmul %80, %5, %cst_35 {dimension_numbers = #tpu.dot_dimension_numbers<[1], [0], [0], [1], [0, 0, 1, 1], [], []>} : vector<128x128xf32>, vector<128x128xf32>, vector<128x128xf32> -> vector<128x128xf32>
    %82 = vector.extract_strided_slice %9 {offsets = [0, 3], sizes = [128, 1], strides = [1, 1]} : vector<128x4xf32> to vector<128x1xf32>
    %83 = vector.broadcast %82 : vector<128x1xf32> to vector<128x128xf32>
    %84 = arith.addf %81, %83 : vector<128x128xf32>
    %85 = vector.extract_strided_slice %11 {offsets = [3, 0], sizes = [1, 128], strides = [1, 1]} : vector<4x128xf32> to vector<1x128xf32>
    %86 = vector.broadcast %85 : vector<1x128xf32> to vector<128x128xf32>
    %87 = arith.addf %84, %86 : vector<128x128xf32>
    %88 = arith.mulf %87, %19 : vector<128x128xf32>
    %89 = arith.addf %88, %40 : vector<128x128xf32>
    %c0_36 = arith.constant 0 : index
    %c3 = arith.constant 3 : index
    %c0_37 = arith.constant 0 : index
    %c0_38 = arith.constant 0 : index
    %90 = vector.load %arg9[%c0_36, %c3, %c0_37, %c0_38] : memref<1x4x128x128xf32, #tpu.memory_space<vmem>>, vector<1x1x128x128xf32>
    %91 = vector.shape_cast %90 : vector<1x1x128x128xf32> to vector<128x128xf32>
    %92 = vector.shape_cast %89 : vector<128x128xf32> to vector<1x1x128x128xf32>
    tpu.vector_store %arg9[%c0_36, %c3, %c0_37, %c0_38], %92 {strides = array<i32>} : memref<1x4x128x128xf32, #tpu.memory_space<vmem>>, vector<1x1x128x128xf32>,
    return
  }
  func.func @transform_0(%arg0: i32, %arg1: i32) -> (i32, i32, i32) {
    %c0_i32 = arith.constant 0 : i32
    %c0_i32_0 = arith.constant 0 : i32
    return %arg0, %arg1, %c0_i32 : i32, i32, i32
  }
  func.func @transform_1(%arg0: i32, %arg1: i32) -> (i32, i32, i32) {
    %c0_i32 = arith.constant 0 : i32
    %c0_i32_0 = arith.constant 0 : i32
    %c0_i32_1 = arith.constant 0 : i32
    return %arg0, %c0_i32, %c0_i32_0 : i32, i32, i32
  }
  func.func @transform_2(%arg0: i32, %arg1: i32) -> (i32, i32, i32) {
    %c0_i32 = arith.constant 0 : i32
    %c0_i32_0 = arith.constant 0 : i32
    return %arg0, %arg1, %c0_i32 : i32, i32, i32
  }
  func.func @transform_3(%arg0: i32, %arg1: i32) -> (i32, i32, i32) {
    %c0_i32 = arith.constant 0 : i32
    %c0_i32_0 = arith.constant 0 : i32
    %c0_i32_1 = arith.constant 0 : i32
    return %arg0, %c0_i32, %c0_i32_0 : i32, i32, i32
  }
  func.func @transform_4(%arg0: i32, %arg1: i32) -> (i32, i32, i32) {
    %c0_i32 = arith.constant 0 : i32
    %c0_i32_0 = arith.constant 0 : i32
    %c0_i32_1 = arith.constant 0 : i32
    return %arg0, %c0_i32, %c0_i32_0 : i32, i32, i32
  }
  func.func @transform_5(%arg0: i32, %arg1: i32) -> (i32, i32, i32) {
    %c0_i32 = arith.constant 0 : i32
    %c0_i32_0 = arith.constant 0 : i32
    %c0_i32_1 = arith.constant 0 : i32
    return %arg0, %c0_i32, %c0_i32_0 : i32, i32, i32
  }
  func.func @transform_6(%arg0: i32, %arg1: i32) -> (i32, i32) {
    %c0_i32 = arith.constant 0 : i32
    %c0_i32_0 = arith.constant 0 : i32
    %c0_i32_1 = arith.constant 0 : i32
    return %c0_i32, %c0_i32_0 : i32, i32
  }
  func.func @transform_7(%arg0: i32, %arg1: i32) -> (i32, i32, i32, i32) {
    %c0_i32 = arith.constant 0 : i32
    %c0_i32_0 = arith.constant 0 : i32
    %c0_i32_1 = arith.constant 0 : i32
    return %arg0, %c0_i32, %arg1, %c0_i32_0 : i32, i32, i32, i32
  }
}

</mosaic_0001>

<llo_original>
// kernel: tpu_custom_call.1
$region0: #{tpu_custom_call.1}
  #allocation0 [shape = 'u32[]', space=smem, size = 0x4, offset = 0x4, fixed_abs, tag = 'smem constant byte address 0x4 - core index']
  #allocation1 [shape = 'u32[144,128]{1,0:T(1,128)}', space=vmem, size = 0x12000, scoped, tag = 'internal scratch']
  %s0 = inlined_call_operand.vmem [shape: f32[2,128,32], index: 0, kind: input, shape index: {}]
  %s1 = inlined_call_operand.vmem [shape: f32[2,128,128], index: 1, kind: input, shape index: {}]
  %s2 = inlined_call_operand.vmem [shape: f32[2,128,4], index: 2, kind: input, shape index: {}]
  %s3 = inlined_call_operand.vmem [shape: f32[2,4,128], index: 3, kind: input, shape index: {}]
  %s4 = inlined_call_operand.vmem [shape: f32[2,128,1], index: 4, kind: input, shape index: {}]
  %s5 = inlined_call_operand.vmem [shape: f32[2,1,128], index: 5, kind: input, shape index: {}]
  %s6 = inlined_call_operand.vmem [shape: f32[32,512], index: 6, kind: input, shape index: {}]
  %s7 = inlined_call_operand.hbm [shape: f32[2,4,128,128], index: 7, kind: output, shape index: {}]
  %s8 = sld [smem:[#allocation0]]
  $region61: #{tpu_custom_call.1} parent=0
    _
  %s10 = ssub.s32 1, %s8
  %s11 = scalar_select 0, %s10, %s8
  $region1: #{tpu_custom_call.1} parent=0
    #allocation2 [shape = 'u8[524288]{0}', space=vmem, size = 0x80000, scoped, tag = 'output window, operand 0']
    #allocation3 [shape = 's32[2]{0}', space=sflag, size = 0x8, scoped, tag = 'scoped memory for tpu_custom_call.1']
    %12 = vsyncpa [#allocation3], 0
    %s13 = scalar_lea.sflag [#allocation3], 1
    %14 = vsyncpa %s13, 0
    loop: start=0, step=1, limit=4
    $region2: #{tpu_custom_call.1} parent=1 // loop_pre_header
      _
    $region3: #{tpu_custom_call.1} parent=1 // loop_header
      %s16 = sphi 0, %s20
      %p17 = scmp.ge.s32.totalorder %s16, 4
      %s23 = sphi 0, %s35
      %s24 = sphi 0, %s31
      %s25 = sphi 0, %s23
      %s26 = sphi 0, %s24
      %s27 = sphi 0, %s25
      %s28 = sphi 0, %s26
      %s40 = sphi 0, %s42
      %s43 = sphi 0, %s40
      %s44 = sphi 0, %s43
      %s60 = sphi 0, %s44
      %s66 = sphi 0, %s68
      %s69 = sphi 0, %s66
      %s70 = sphi 0, %s69
      %s86 = sphi 0, %s70
      %s94 = sphi 0, %s96
      %s97 = sphi 0, %s94
      %s98 = sphi 0, %s97
      %s114 = sphi 0, %s98
      %s120 = sphi 0, %s122
      %s123 = sphi 0, %s120
      %s124 = sphi 0, %s123
      %s140 = sphi 0, %s124
      %s146 = sphi 0, %s148
      %s149 = sphi 0, %s146
      %s150 = sphi 0, %s149
      %s166 = sphi 0, %s150
      %s172 = sphi 0, %s174
      %s175 = sphi 0, %s172
      %s176 = sphi 0, %s175
      %s192 = sphi 0, %s176
      %s196 = sphi 0, %s196
      %s198 = sphi 0, %s196
      %s199 = sphi 0, %s198
      %s213 = sphi 0, %s199
      %s221 = sphi 0, %s223
      %s224 = sphi 0, %s221
      %s225 = sphi 0, %s224
      %s241 = sphi 0, %s225
    $region4: #{tpu_custom_call.1} parent=1 // loop_header_branch
      %19 = sbr.rel (%p17) target = $region8
    $region5: #{tpu_custom_call.1} parent=1 // loop_body
      %s21 = ssub.s32 %s16, 1
      %s22 = ssub.s32 %s16, 2
      %s29 = sadd.s32 1, %s24
      %p30 = scmp.ge.s32.totalorder %s29, 1
      %s31 = scalar_select %p30, 0, %s29
      %s32 = sadd.s32 1, %s23
      %s33 = scalar_select %p30, %s32, %s23
      %p34 = scmp.ge.s32.totalorder %s33, 2
      %s35 = scalar_select %p34, 0, %s33
      %s36 = ssub.s32 %s23, %s35
      %s37 = ssub.s32 %s24, %s31
      %s38 = sor.u32 %s36, %s37
      %p39 = scmp.eq.s32.totalorder %s38, 0
      %s41 = sadd.s32 %s40, 1
      %s42 = scalar_select %p39, %s40, %s41
      %p45 = pneg %p39
      %p46 = scmp.eq.s32.totalorder %s16, 1
      %p47 = por %p45, %p46
      %p48 = scmp.ne.s32.totalorder %s40, %s43
      %p49 = scmp.eq.s32.totalorder %s16, 0
      %p50 = por %p48, %p49
      %p51 = scmp.ne.s32.totalorder %s40, %s43
      %p52 = scmp.eq.s32.totalorder %s21, 1
      %p53 = por %p51, %p52
      %p54 = scmp.ne.s32.totalorder %s43, %s44
      %p55 = scmp.eq.s32.totalorder %s21, 0
      %p56 = por %p54, %p55
      %p57 = scmp.ne.s32.totalorder %s43, %s44
      %p58 = scmp.eq.s32.totalorder %s22, 1
      %p59 = por %p57, %p58
      %p61 = scmp.ne.s32.totalorder %s44, %s60
      %p62 = scmp.eq.s32.totalorder %s22, 0
      %p63 = por %p61, %p62
      %s64 = ssub.s32 %s23, %s35
      %p65 = scmp.eq.s32.totalorder %s64, 0
      %s67 = sadd.s32 %s66, 1
      %s68 = scalar_select %p65, %s66, %s67
      %p71 = pneg %p65
      %p72 = scmp.eq.s32.totalorder %s16, 1
      %p73 = por %p71, %p72
      %p74 = scmp.ne.s32.totalorder %s66, %s69
      %p75 = scmp.eq.s32.totalorder %s16, 0
      %p76 = por %p74, %p75
      %p77 = scmp.ne.s32.totalorder %s66, %s69
      %p78 = scmp.eq.s32.totalorder %s21, 1
      %p79 = por %p77, %p78
      %p80 = scmp.ne.s32.totalorder %s69, %s70
      %p81 = scmp.eq.s32.totalorder %s21, 0
      %p82 = por %p80, %p81
      %p83 = scmp.ne.s32.totalorder %s69, %s70
      %p84 = scmp.eq.s32.totalorder %s22, 1
      %p85 = por %p83, %p84
      %p87 = scmp.ne.s32.totalorder %s70, %s86
      %p88 = scmp.eq.s32.totalorder %s22, 0
      %p89 = por %p87, %p88
      %s90 = ssub.s32 %s23, %s35
      %s91 = ssub.s32 %s24, %s31
      %s92 = sor.u32 %s90, %s91
      %p93 = scmp.eq.s32.totalorder %s92, 0
      %s95 = sadd.s32 %s94, 1
      %s96 = scalar_select %p93, %s94, %s95
      %p99 = pneg %p93
      %p100 = scmp.eq.s32.totalorder %s16, 1
      %p101 = por %p99, %p100
      %p102 = scmp.ne.s32.totalorder %s94, %s97
      %p103 = scmp.eq.s32.totalorder %s16, 0
      %p104 = por %p102, %p103
      %p105 = scmp.ne.s32.totalorder %s94, %s97
      %p106 = scmp.eq.s32.totalorder %s21, 1
      %p107 = por %p105, %p106
      %p108 = scmp.ne.s32.totalorder %s97, %s98
      %p109 = scmp.eq.s32.totalorder %s21, 0
      %p110 = por %p108, %p109
      %p111 = scmp.ne.s32.totalorder %s97, %s98
      %p112 = scmp.eq.s32.totalorder %s22, 1
      %p113 = por %p111, %p112
      %p115 = scmp.ne.s32.totalorder %s98, %s114
      %p116 = scmp.eq.s32.totalorder %s22, 0
      %p117 = por %p115, %p116
      %s118 = ssub.s32 %s23, %s35
      %p119 = scmp.eq.s32.totalorder %s118, 0
      %s121 = sadd.s32 %s120, 1
      %s122 = scalar_select %p119, %s120, %s121
      %p125 = pneg %p119
      %p126 = scmp.eq.s32.totalorder %s16, 1
      %p127 = por %p125, %p126
      %p128 = scmp.ne.s32.totalorder %s120, %s123
      %p129 = scmp.eq.s32.totalorder %s16, 0
      %p130 = por %p128, %p129
      %p131 = scmp.ne.s32.totalorder %s120, %s123
      %p132 = scmp.eq.s32.totalorder %s21, 1
      %p133 = por %p131, %p132
      %p134 = scmp.ne.s32.totalorder %s123, %s124
      %p135 = scmp.eq.s32.totalorder %s21, 0
      %p136 = por %p134, %p135
      %p137 = scmp.ne.s32.totalorder %s123, %s124
      %p138 = scmp.eq.s32.totalorder %s22, 1
      %p139 = por %p137, %p138
      %p141 = scmp.ne.s32.totalorder %s124, %s140
      %p142 = scmp.eq.s32.totalorder %s22, 0
      %p143 = por %p141, %p142
      %s144 = ssub.s32 %s23, %s35
      %p145 = scmp.eq.s32.totalorder %s144, 0
      %s147 = sadd.s32 %s146, 1
      %s148 = scalar_select %p145, %s146, %s147
      %p151 = pneg %p145
      %p152 = scmp.eq.s32.totalorder %s16, 1
      %p153 = por %p151, %p152
      %p154 = scmp.ne.s32.totalorder %s146, %s149
      %p155 = scmp.eq.s32.totalorder %s16, 0
      %p156 = por %p154, %p155
      %p157 = scmp.ne.s32.totalorder %s146, %s149
      %p158 = scmp.eq.s32.totalorder %s21, 1
      %p159 = por %p157, %p158
      %p160 = scmp.ne.s32.totalorder %s149, %s150
      %p161 = scmp.eq.s32.totalorder %s21, 0
      %p162 = por %p160, %p161
      %p163 = scmp.ne.s32.totalorder %s149, %s150
      %p164 = scmp.eq.s32.totalorder %s22, 1
      %p165 = por %p163, %p164
      %p167 = scmp.ne.s32.totalorder %s150, %s166
      %p168 = scmp.eq.s32.totalorder %s22, 0
      %p169 = por %p167, %p168
      %s170 = ssub.s32 %s23, %s35
      %p171 = scmp.eq.s32.totalorder %s170, 0
      %s173 = sadd.s32 %s172, 1
      %s174 = scalar_select %p171, %s172, %s173
      %p177 = pneg %p171
      %p178 = scmp.eq.s32.totalorder %s16, 1
      %p179 = por %p177, %p178
      %p180 = scmp.ne.s32.totalorder %s172, %s175
      %p181 = scmp.eq.s32.totalorder %s16, 0
      %p182 = por %p180, %p181
      %p183 = scmp.ne.s32.totalorder %s172, %s175
      %p184 = scmp.eq.s32.totalorder %s21, 1
      %p185 = por %p183, %p184
      %p186 = scmp.ne.s32.totalorder %s175, %s176
      %p187 = scmp.eq.s32.totalorder %s21, 0
      %p188 = por %p186, %p187
      %p189 = scmp.ne.s32.totalorder %s175, %s176
      %p190 = scmp.eq.s32.totalorder %s22, 1
      %p191 = por %p189, %p190
      %p193 = scmp.ne.s32.totalorder %s176, %s192
      %p194 = scmp.eq.s32.totalorder %s22, 0
      %p195 = por %p193, %p194
      %s197 = sadd.s32 %s196, 1
      %p200 = scmp.eq.s32.totalorder %s16, 1
      %p201 = scmp.ne.s32.totalorder %s196, %s198
      %p202 = scmp.eq.s32.totalorder %s16, 0
      %p203 = por %p201, %p202
      %p204 = scmp.ne.s32.totalorder %s196, %s198
      %p205 = scmp.eq.s32.totalorder %s21, 1
      %p206 = por %p204, %p205
      %p207 = scmp.ne.s32.totalorder %s198, %s199
      %p208 = scmp.eq.s32.totalorder %s21, 0
      %p209 = por %p207, %p208
      %p210 = scmp.ne.s32.totalorder %s198, %s199
      %p211 = scmp.eq.s32.totalorder %s22, 1
      %p212 = por %p210, %p211
      %p214 = scmp.ne.s32.totalorder %s199, %s213
      %p215 = scmp.eq.s32.totalorder %s22, 0
      %p216 = por %p214, %p215
      %s217 = ssub.s32 %s23, %s35
      %s218 = ssub.s32 %s24, %s31
      %s219 = sor.u32 %s217, %s218
      %p220 = scmp.eq.s32.totalorder %s219, 0
      %s222 = sadd.s32 %s221, 1
      %s223 = scalar_select %p220, %s221, %s222
      %p226 = pneg %p220
      %p227 = scmp.eq.s32.totalorder %s16, 1
      %p228 = por %p226, %p227
      %p229 = scmp.ne.s32.totalorder %s221, %s224
      %p230 = scmp.eq.s32.totalorder %s16, 0
      %p231 = por %p229, %p230
      %p232 = scmp.ne.s32.totalorder %s221, %s224
      %p233 = scmp.eq.s32.totalorder %s21, 1
      %p234 = por %p232, %p233
      %p235 = scmp.ne.s32.totalorder %s224, %s225
      %p236 = scmp.eq.s32.totalorder %s21, 0
      %p237 = por %p235, %p236
      %p238 = scmp.ne.s32.totalorder %s224, %s225
      %p239 = scmp.eq.s32.totalorder %s22, 1
      %p240 = por %p238, %p239
      %p242 = scmp.ne.s32.totalorder %s225, %s241
      %p243 = scmp.eq.s32.totalorder %s22, 0
      %p244 = por %p242, %p243
      %p245 = scmp.le.s32.totalorder 1, %s16
      %p246 = scmp.lt.s32.totalorder %s16, 3
      %p247 = pnand %p245, %p246
      %p248 = pneg %p247
      // Predicated region
      $region9: #{tpu_custom_call.1} parent=5 // pred_check
        _
      $region10: #{tpu_custom_call.1} parent=5 // pred_check_branch
        %250 = sbr.rel (%p247) target = $region12
      $region11: #{tpu_custom_call.1} parent=5 // pred_region
        %s251 = ssub.s32 %s16, 1
        // Predicated region
        $region13: #{tpu_custom_call.1} parent=11 // pred_check
          %p252 = pneg %p209
        $region14: #{tpu_custom_call.1} parent=11 // pred_check_branch
          %254 = sbr.rel (%p252) target = $region16
        $region15: #{tpu_custom_call.1} parent=11 // pred_region
          _
        $region16: #{tpu_custom_call.1} parent=11 // pred_fallthru
          _
      $region12: #{tpu_custom_call.1} parent=5 // pred_fallthru
        _
      %p255 = scmp.lt.s32.totalorder %s16, 2
      // Predicated region
      $region17: #{tpu_custom_call.1} parent=5 // pred_check
        %p256 = pneg %p255
      $region18: #{tpu_custom_call.1} parent=5 // pred_check_branch
        %258 = sbr.rel (%p256) target = $region20
      $region19: #{tpu_custom_call.1} parent=5 // pred_region
        // Predicated region
        $region21: #{tpu_custom_call.1} parent=19 // pred_check
          %p259 = pneg %p50
        $region22: #{tpu_custom_call.1} parent=19 // pred_check_branch
          %261 = sbr.rel (%p259) target = $region24
        $region23: #{tpu_custom_call.1} parent=19 // pred_region
          %s262 = smul.u32 16, %s24
          %p263 = scmp.lt.s32.totalorder %s23, 1
          %s264 = scalar_select %p263, %s23, 1
          %p265 = scmp.lt.s32.totalorder %s262, 15
          %s266 = scalar_select %p265, %s262, 15
          %s267 = smul.addr %s264, 16
          %s268 = sadd.s32 %s266, %s267
          %s269 = smul.addr %s268, 8
          %s270 = scalar_lea.vmem %s0, %s269
          %s271 = smul.u32 16, %s24
        $region24: #{tpu_custom_call.1} parent=19 // pred_fallthru
          _
        // Predicated region
        $region25: #{tpu_custom_call.1} parent=19 // pred_check
          %p272 = pneg %p76
        $region26: #{tpu_custom_call.1} parent=19 // pred_check_branch
          %274 = sbr.rel (%p272) target = $region28
        $region27: #{tpu_custom_call.1} parent=19 // pred_region
          %p275 = scmp.lt.s32.totalorder %s23, 1
          %s276 = scalar_select %p275, %s23, 1
          %s277 = smul.addr %s276, 16
          %s278 = smul.addr %s277, 8
          %s279 = scalar_lea.vmem %s1, %s278
        $region28: #{tpu_custom_call.1} parent=19 // pred_fallthru
          _
        // Predicated region
        $region29: #{tpu_custom_call.1} parent=19 // pred_check
          %p280 = pneg %p104
        $region30: #{tpu_custom_call.1} parent=19 // pred_check_branch
          %282 = sbr.rel (%p280) target = $region32
        $region31: #{tpu_custom_call.1} parent=19 // pred_region
          %s283 = smul.u32 16, %s24
          %p284 = scmp.lt.s32.totalorder %s23, 1
          %s285 = scalar_select %p284, %s23, 1
          %p286 = scmp.lt.s32.totalorder %s283, 15
          %s287 = scalar_select %p286, %s283, 15
          %s288 = smul.addr %s285, 16
          %s289 = sadd.s32 %s287, %s288
          %s290 = smul.addr %s289, 8
          %s291 = scalar_lea.vmem %s2, %s290
          %s292 = smul.u32 16, %s24
        $region32: #{tpu_custom_call.1} parent=19 // pred_fallthru
          _
        // Predicated region
        $region33: #{tpu_custom_call.1} parent=19 // pred_check
          %p293 = pneg %p130
        $region34: #{tpu_custom_call.1} parent=19 // pred_check_branch
          %295 = sbr.rel (%p293) target = $region36
        $region35: #{tpu_custom_call.1} parent=19 // pred_region
          %p296 = scmp.lt.s32.totalorder %s23, 1
          %s297 = scalar_select %p296, %s23, 1
          %s298 = smul.addr %s297, 4
          %s299 = scalar_lea.vmem %s3, %s298
        $region36: #{tpu_custom_call.1} parent=19 // pred_fallthru
          _
        // Predicated region
        $region37: #{tpu_custom_call.1} parent=19 // pred_check
          %p300 = pneg %p156
        $region38: #{tpu_custom_call.1} parent=19 // pred_check_branch
          %302 = sbr.rel (%p300) target = $region40
        $region39: #{tpu_custom_call.1} parent=19 // pred_region
          %p303 = scmp.lt.s32.totalorder %s23, 1
          %s304 = scalar_select %p303, %s23, 1
          %s305 = smul.addr %s304, 16
          %s306 = smul.addr %s305, 8
          %s307 = scalar_lea.vmem %s4, %s306
        $region40: #{tpu_custom_call.1} parent=19 // pred_fallthru
          _
        // Predicated region
        $region41: #{tpu_custom_call.1} parent=19 // pred_check
          %p308 = pneg %p182
        $region42: #{tpu_custom_call.1} parent=19 // pred_check_branch
          %310 = sbr.rel (%p308) target = $region44
        $region43: #{tpu_custom_call.1} parent=19 // pred_region
          %p311 = scmp.lt.s32.totalorder %s23, 1
          %s312 = scalar_select %p311, %s23, 1
          %s313 = scalar_lea.vmem %s5, %s312
        $region44: #{tpu_custom_call.1} parent=19 // pred_fallthru
          _
      $region20: #{tpu_custom_call.1} parent=5 // pred_fallthru
        _
      %p314 = scmp.le.s32.totalorder 1, %s16
      %p315 = scmp.lt.s32.totalorder %s16, 3
      %p316 = pnand %p314, %p315
      %p317 = pneg %p316
      // Predicated region
      $region45: #{tpu_custom_call.1} parent=5 // pred_check
        _
      $region46: #{tpu_custom_call.1} parent=5 // pred_check_branch
        %319 = sbr.rel (%p316) target = $region48
      $region47: #{tpu_custom_call.1} parent=5 // pred_region
        %s320 = ssub.s32 %s16, 1
        %s321 = smul.u32 16, %s26
        %p322 = scmp.lt.s32.totalorder %s25, 1
        %s323 = scalar_select %p322, %s25, 1
        %p324 = scmp.lt.s32.totalorder %s321, 15
        %s325 = scalar_select %p324, %s321, 15
        %s326 = smul.addr %s323, 16
        %s327 = sadd.s32 %s325, %s326
        %s328 = smul.addr %s327, 8
        %s329 = scalar_lea.vmem %s0, %s328
        %p330 = pneg %p56
        %p331 = pneg %p53
        %p332 = scmp.lt.s32.totalorder %s25, 1
        %s333 = scalar_select %p332, %s25, 1
        %s334 = smul.addr %s333, 16
        %s335 = smul.addr %s334, 8
        %s336 = scalar_lea.vmem %s1, %s335
        %p337 = pneg %p82
        %p338 = pneg %p79
        %s339 = smul.u32 16, %s26
        %p340 = scmp.lt.s32.totalorder %s25, 1
        %s341 = scalar_select %p340, %s25, 1
        %p342 = scmp.lt.s32.totalorder %s339, 15
        %s343 = scalar_select %p342, %s339, 15
        %s344 = smul.addr %s341, 16
        %s345 = sadd.s32 %s343, %s344
        %s346 = smul.addr %s345, 8
        %s347 = scalar_lea.vmem %s2, %s346
        %p348 = pneg %p110
        %p349 = pneg %p107
        %p350 = scmp.lt.s32.totalorder %s25, 1
        %s351 = scalar_select %p350, %s25, 1
        %s352 = smul.addr %s351, 4
        %s353 = scalar_lea.vmem %s3, %s352
        %p354 = pneg %p136
        %p355 = pneg %p133
        %p356 = scmp.lt.s32.totalorder %s25, 1
        %s357 = scalar_select %p356, %s25, 1
        %s358 = smul.addr %s357, 16
        %s359 = smul.addr %s358, 8
        %s360 = scalar_lea.vmem %s4, %s359
        %p361 = pneg %p162
        %p362 = pneg %p159
        %p363 = scmp.lt.s32.totalorder %s25, 1
        %s364 = scalar_select %p363, %s25, 1
        %s365 = scalar_lea.vmem %s5, %s364
        %p366 = pneg %p188
        %p367 = pneg %p185
        %p368 = pneg %p209
        %p369 = pneg %p206
        %p370 = pneg %p237
        %p371 = pneg %p234
        %s372 = sand.u32 %s224, 1
        %s373 = scalar_lea.sflag [#allocation3], %s372
        %s374 = sand.u32 %s224, 1
        %s375 = smul.addr %s374, 512
        %s376 = scalar_lea.vmem [#allocation2], %s375
        %s377 = smul.u32 16, %s26
        %p378 = scmp.lt.s32.totalorder %s25, 1
        %s379 = scalar_select %p378, %s25, 1
        %p380 = scmp.lt.s32.totalorder %s377, 15
        %s381 = scalar_select %p380, %s377, 15
        %s382 = smul.addr %s379, 16
        %s383 = sadd.s32 %s381, %s382
        %s384 = smul.addr %s383, 8
        %s385 = scalar_lea.vmem %s0, %s384
        %s386 = smul.u32 16, %s26
        %p387 = scmp.lt.s32.totalorder %s25, 1
        %s388 = scalar_select %p387, %s25, 1
        %s389 = smul.addr %s388, 16
        %s390 = smul.addr %s389, 8
        %s391 = scalar_lea.vmem %s1, %s390
        %s392 = smul.u32 16, %s26
        %p393 = scmp.lt.s32.totalorder %s25, 1
        %s394 = scalar_select %p393, %s25, 1
        %p395 = scmp.lt.s32.totalorder %s392, 15
        %s396 = scalar_select %p395, %s392, 15
        %s397 = smul.addr %s394, 16
        %s398 = sadd.s32 %s396, %s397
        %s399 = smul.addr %s398, 8
        %s400 = scalar_lea.vmem %s2, %s399
        %s401 = smul.u32 16, %s26
        %p402 = scmp.lt.s32.totalorder %s25, 1
        %s403 = scalar_select %p402, %s25, 1
        %s404 = smul.addr %s403, 4
        %s405 = scalar_lea.vmem %s3, %s404
        %p406 = scmp.lt.s32.totalorder %s25, 1
        %s407 = scalar_select %p406, %s25, 1
        %s408 = smul.addr %s407, 16
        %s409 = smul.addr %s408, 8
        %s410 = scalar_lea.vmem %s4, %s409
        %p411 = scmp.lt.s32.totalorder %s25, 1
        %s412 = scalar_select %p411, %s25, 1
        %s413 = scalar_lea.vmem %s5, %s412
        %s414 = smul.u32 16, %s26
        %s415 = smul.u32 %s26, 128
        %v416 = vld [vmem:[%s385] sm:$0xff]
        %v417 = vld [vmem:[%s385 + $0x8] sm:$0xff]
        %v418 = vld [vmem:[%s385 + $0x10] sm:$0xff]
        %v419 = vld [vmem:[%s385 + $0x18] sm:$0xff]
        %v420 = vld [vmem:[%s385 + $0x20] sm:$0xff]
        %v421 = vld [vmem:[%s385 + $0x28] sm:$0xff]
        %v422 = vld [vmem:[%s385 + $0x30] sm:$0xff]
        %v423 = vld [vmem:[%s385 + $0x38] sm:$0xff]
        %v424 = vld [vmem:[%s385 + $0x40] sm:$0xff]
        %v425 = vld [vmem:[%s385 + $0x48] sm:$0xff]
        %v426 = vld [vmem:[%s385 + $0x50] sm:$0xff]
        %v427 = vld [vmem:[%s385 + $0x58] sm:$0xff]
        %v428 = vld [vmem:[%s385 + $0x60] sm:$0xff]
        %v429 = vld [vmem:[%s385 + $0x68] sm:$0xff]
        %v430 = vld [vmem:[%s385 + $0x70] sm:$0xff]
        %v431 = vld [vmem:[%s385 + $0x78] sm:$0xff]
        %v432 = vld [vmem:[%s391] sm:$0xff]
        %v433 = vld [vmem:[%s391 + $0x8] sm:$0xff]
        %v434 = vld [vmem:[%s391 + $0x10] sm:$0xff]
        %v435 = vld [vmem:[%s391 + $0x18] sm:$0xff]
        %v436 = vld [vmem:[%s391 + $0x20] sm:$0xff]
        %v437 = vld [vmem:[%s391 + $0x28] sm:$0xff]
        %v438 = vld [vmem:[%s391 + $0x30] sm:$0xff]
        %v439 = vld [vmem:[%s391 + $0x38] sm:$0xff]
        %v440 = vld [vmem:[%s391 + $0x40] sm:$0xff]
        %v441 = vld [vmem:[%s391 + $0x48] sm:$0xff]
        %v442 = vld [vmem:[%s391 + $0x50] sm:$0xff]
        %v443 = vld [vmem:[%s391 + $0x58] sm:$0xff]
        %v444 = vld [vmem:[%s391 + $0x60] sm:$0xff]
        %v445 = vld [vmem:[%s391 + $0x68] sm:$0xff]
        %v446 = vld [vmem:[%s391 + $0x70] sm:$0xff]
        %v447 = vld [vmem:[%s391 + $0x78] sm:$0xff]
        %v448 = vld [vmem:[%s6] sm:$0xff]
        %v449 = vld [vmem:[%s6 + $0x8] sm:$0xff]
        %v450 = vld [vmem:[%s6 + $0x10] sm:$0xff]
        %v451 = vld [vmem:[%s6 + $0x18] sm:$0xff]
        %v452 = vld [vmem:[%s6 + $0x20] sm:$0xff]
        %v453 = vld [vmem:[%s6 + $0x28] sm:$0xff]
        %v454 = vld [vmem:[%s6 + $0x30] sm:$0xff]
        %v455 = vld [vmem:[%s6 + $0x38] sm:$0xff]
        %v456 = vld [vmem:[%s6 + $0x40] sm:$0xff]
        %v457 = vld [vmem:[%s6 + $0x48] sm:$0xff]
        %v458 = vld [vmem:[%s6 + $0x50] sm:$0xff]
        %v459 = vld [vmem:[%s6 + $0x58] sm:$0xff]
        %v460 = vld [vmem:[%s6 + $0x60] sm:$0xff]
        %v461 = vld [vmem:[%s6 + $0x68] sm:$0xff]
        %v462 = vld [vmem:[%s6 + $0x70] sm:$0xff]
        %v463 = vld [vmem:[%s6 + $0x78] sm:$0xff]
        %vm464 = vcmask 261120
        %v466 = vsel %vm464, %v416, 0
        %v469 = vsel %vm464, %v417, 0
        %v472 = vsel %vm464, %v418, 0
        %v475 = vsel %vm464, %v419, 0
        %v478 = vsel %vm464, %v420, 0
        %v481 = vsel %vm464, %v421, 0
        %v484 = vsel %vm464, %v422, 0
        %v487 = vsel %vm464, %v423, 0
        %v490 = vsel %vm464, %v424, 0
        %v493 = vsel %vm464, %v425, 0
        %v496 = vsel %vm464, %v426, 0
        %v499 = vsel %vm464, %v427, 0
        %v502 = vsel %vm464, %v428, 0
        %v505 = vsel %vm464, %v429, 0
        %v508 = vsel %vm464, %v430, 0
        %v511 = vsel %vm464, %v431, 0
        %513 = vmatprep.subr.mxu0 0.0
        %514 = vmatpush1.msra.mxu0 0.0
        %515 = vmatprep.subr.mxu0 0.0
        %516 = vmatpush1.msra.mxu0 0.0
        %517 = vmatprep.subr.mxu0 0.0
        %518 = vmatpush1.msra.mxu0 0.0
        %519 = vmatprep.subr.mxu0 0.0
        %520 = vmatpush1.msra.mxu0 0.0
        %521 = vmatprep.subr.mxu0 0.0
        %522 = vmatpush1.msra.mxu0 0.0
        %523 = vmatprep.subr.mxu0 0.0
        %524 = vmatpush1.msra.mxu0 0.0
        %525 = vmatprep.subr.mxu0 0.0
        %526 = vmatpush1.msra.mxu0 0.0
        %527 = vmatprep.subr.mxu0 0.0
        %528 = vmatpush1.msra.mxu0 0.0
        %529 = vmatprep.subr.mxu0 0.0
        %530 = vmatpush1.msra.mxu0 0.0
        %531 = vmatprep.subr.mxu0 0.0
        %532 = vmatpush1.msra.mxu0 0.0
        %533 = vmatprep.subr.mxu0 0.0
        %534 = vmatpush1.msra.mxu0 0.0
        %535 = vmatprep.subr.mxu0 0.0
        %536 = vmatpush1.msra.mxu0 0.0
        %537 = vmatprep.subr.mxu0 %v461
        %538 = vmatpush1.msra.mxu0 %v460
        %539 = vmatprep.subr.mxu0 %v457
        %540 = vmatpush1.msra.mxu0 %v456
        %541 = vmatprep.subr.mxu0 %v453
        %542 = vmatpush1.msra.mxu0 %v452
        %543 = vmatprep.subr.mxu0 %v449
        %544 = vmatpush1.msra.mxu0 %v448
        %545 = vmatprep.subr.mxu0 0.0
        %546 = vmatpush2.msra.mxu0 0.0
        %547 = vmatprep.subr.mxu0 0.0
        %548 = vmatpush2.msra.mxu0 0.0
        %549 = vmatprep.subr.mxu0 0.0
        %550 = vmatpush2.msra.mxu0 0.0
        %551 = vmatprep.subr.mxu0 0.0
        %552 = vmatpush2.msra.mxu0 0.0
        %553 = vmatprep.subr.mxu0 0.0
        %554 = vmatpush2.msra.mxu0 0.0
        %555 = vmatprep.subr.mxu0 0.0
        %556 = vmatpush2.msra.mxu0 0.0
        %557 = vmatprep.subr.mxu0 0.0
        %558 = vmatpush2.msra.mxu0 0.0
        %559 = vmatprep.subr.mxu0 0.0
        %560 = vmatpush2.msra.mxu0 0.0
        %561 = vmatprep.subr.mxu0 0.0
        %562 = vmatpush2.msra.mxu0 0.0
        %563 = vmatprep.subr.mxu0 0.0
        %564 = vmatpush2.msra.mxu0 0.0
        %565 = vmatprep.subr.mxu0 0.0
        %566 = vmatpush2.msra.mxu0 0.0
        %567 = vmatprep.subr.mxu0 0.0
        %568 = vmatpush2.msra.mxu0 0.0
        %569 = vmatprep.subr.mxu0 0.0
        %570 = vmatpush2.msra.mxu0 0.0
        %571 = vmatprep.subr.mxu0 0.0
        %572 = vmatpush2.msra.mxu0 0.0
        %573 = vmatprep.subr.mxu0 0.0
        %574 = vmatpush2.msra.mxu0 0.0
        %575 = vmatprep.subr.mxu0 0.0
        %576 = vmatpush2.msra.mxu0 0.0
        %577 = vmatprep.mubr.f32.mxu0 0.0
        %578 = vmatmul.mubr.f32.gmra.mxu0 %v466
        %v579 = vpop.f32.mrf.mxu0
        %v580 = vadd.f32 0.0, %v579
        %v581 = vpop.f32.mrf.mxu0
        %v582 = vadd.f32 0.0, %v581
        %583 = vmatprep.mubr.f32.mxu0 0.0
        %584 = vmatmul.mubr.f32.gmra.mxu0 %v469
        %v585 = vpop.f32.mrf.mxu0
        %v586 = vadd.f32 0.0, %v585
        %v587 = vpop.f32.mrf.mxu0
        %v588 = vadd.f32 0.0, %v587
        %589 = vmatprep.mubr.f32.mxu0 0.0
        %590 = vmatmul.mubr.f32.gmra.mxu0 %v472
        %v591 = vpop.f32.mrf.mxu0
        %v592 = vadd.f32 0.0, %v591
        %v593 = vpop.f32.mrf.mxu0
        %v594 = vadd.f32 0.0, %v593
        %595 = vmatprep.mubr.f32.mxu0 0.0
        %596 = vmatmul.mubr.f32.gmra.mxu0 %v475
        %v597 = vpop.f32.mrf.mxu0
        %v598 = vadd.f32 0.0, %v597
        %v599 = vpop.f32.mrf.mxu0
        %v600 = vadd.f32 0.0, %v599
        %601 = vmatprep.mubr.f32.mxu0 0.0
        %602 = vmatmul.mubr.f32.gmra.mxu0 %v478
        %v603 = vpop.f32.mrf.mxu0
        %v604 = vadd.f32 0.0, %v603
        %v605 = vpop.f32.mrf.mxu0
        %v606 = vadd.f32 0.0, %v605
        %607 = vmatprep.mubr.f32.mxu0 0.0
        %608 = vmatmul.mubr.f32.gmra.mxu0 %v481
        %v609 = vpop.f32.mrf.mxu0
        %v610 = vadd.f32 0.0, %v609
        %v611 = vpop.f32.mrf.mxu0
        %v612 = vadd.f32 0.0, %v611
        %613 = vmatprep.mubr.f32.mxu0 0.0
        %614 = vmatmul.mubr.f32.gmra.mxu0 %v484
        %v615 = vpop.f32.mrf.mxu0
        %v616 = vadd.f32 0.0, %v615
        %v617 = vpop.f32.mrf.mxu0
        %v618 = vadd.f32 0.0, %v617
        %619 = vmatprep.mubr.f32.mxu0 0.0
        %620 = vmatmul.mubr.f32.gmra.mxu0 %v487
        %v621 = vpop.f32.mrf.mxu0
        %v622 = vadd.f32 0.0, %v621
        %v623 = vpop.f32.mrf.mxu0
        %v624 = vadd.f32 0.0, %v623
        %625 = vmatprep.mubr.f32.mxu0 0.0
        %626 = vmatmul.mubr.f32.gmra.mxu0 %v490
        %v627 = vpop.f32.mrf.mxu0
        %v628 = vadd.f32 0.0, %v627
        %v629 = vpop.f32.mrf.mxu0
        %v630 = vadd.f32 0.0, %v629
        %631 = vmatprep.mubr.f32.mxu0 0.0
        %632 = vmatmul.mubr.f32.gmra.mxu0 %v493
        %v633 = vpop.f32.mrf.mxu0
        %v634 = vadd.f32 0.0, %v633
        %v635 = vpop.f32.mrf.mxu0
        %v636 = vadd.f32 0.0, %v635
        %637 = vmatprep.mubr.f32.mxu0 0.0
        %638 = vmatmul.mubr.f32.gmra.mxu0 %v496
        %v639 = vpop.f32.mrf.mxu0
        %v640 = vadd.f32 0.0, %v639
        %v641 = vpop.f32.mrf.mxu0
        %v642 = vadd.f32 0.0, %v641
        %643 = vmatprep.mubr.f32.mxu0 0.0
        %644 = vmatmul.mubr.f32.gmra.mxu0 %v499
        %v645 = vpop.f32.mrf.mxu0
        %v646 = vadd.f32 0.0, %v645
        %v647 = vpop.f32.mrf.mxu0
        %v648 = vadd.f32 0.0, %v647
        %649 = vmatprep.mubr.f32.mxu0 0.0
        %650 = vmatmul.mubr.f32.gmra.mxu0 %v502
        %v651 = vpop.f32.mrf.mxu0
        %v652 = vadd.f32 0.0, %v651
        %v653 = vpop.f32.mrf.mxu0
        %v654 = vadd.f32 0.0, %v653
        %655 = vmatprep.mubr.f32.mxu0 0.0
        %656 = vmatmul.mubr.f32.gmra.mxu0 %v505
        %v657 = vpop.f32.mrf.mxu0
        %v658 = vadd.f32 0.0, %v657
        %v659 = vpop.f32.mrf.mxu0
        %v660 = vadd.f32 0.0, %v659
        %661 = vmatprep.mubr.f32.mxu0 0.0
        %662 = vmatmul.mubr.f32.gmra.mxu0 %v508
        %v663 = vpop.f32.mrf.mxu0
        %v664 = vadd.f32 0.0, %v663
        %v665 = vpop.f32.mrf.mxu0
        %v666 = vadd.f32 0.0, %v665
        %667 = vmatprep.mubr.f32.mxu0 0.0
        %668 = vmatmul.mubr.f32.gmra.mxu0 %v511
        %v669 = vpop.f32.mrf.mxu0
        %v670 = vadd.f32 0.0, %v669
        %v671 = vpop.f32.mrf.mxu0
        %v672 = vadd.f32 0.0, %v671
        %673 = vdwg.mxu0
        %674 = vmatprep.subr.mxu0 0.0
        %675 = vmatpush1.msra.mxu0 0.0
        %676 = vmatprep.subr.mxu0 0.0
        %677 = vmatpush1.msra.mxu0 0.0
        %678 = vmatprep.subr.mxu0 0.0
        %679 = vmatpush1.msra.mxu0 0.0
        %680 = vmatprep.subr.mxu0 0.0
        %681 = vmatpush1.msra.mxu0 0.0
        %682 = vmatprep.subr.mxu0 0.0
        %683 = vmatpush1.msra.mxu0 0.0
        %684 = vmatprep.subr.mxu0 0.0
        %685 = vmatpush1.msra.mxu0 0.0
        %686 = vmatprep.subr.mxu0 0.0
        %687 = vmatpush1.msra.mxu0 0.0
        %688 = vmatprep.subr.mxu0 0.0
        %689 = vmatpush1.msra.mxu0 0.0
        %690 = vmatprep.subr.mxu0 0.0
        %691 = vmatpush1.msra.mxu0 0.0
        %692 = vmatprep.subr.mxu0 0.0
        %693 = vmatpush1.msra.mxu0 0.0
        %694 = vmatprep.subr.mxu0 0.0
        %695 = vmatpush1.msra.mxu0 0.0
        %696 = vmatprep.subr.mxu0 0.0
        %697 = vmatpush1.msra.mxu0 0.0
        %698 = vmatprep.subr.mxu0 %v463
        %699 = vmatpush1.msra.mxu0 %v462
        %700 = vmatprep.subr.mxu0 %v459
        %701 = vmatpush1.msra.mxu0 %v458
        %702 = vmatprep.subr.mxu0 %v455
        %703 = vmatpush1.msra.mxu0 %v454
        %704 = vmatprep.subr.mxu0 %v451
        %705 = vmatpush1.msra.mxu0 %v450
        %706 = vmatprep.subr.mxu0 0.0
        %707 = vmatpush2.msra.mxu0 0.0
        %708 = vmatprep.subr.mxu0 0.0
        %709 = vmatpush2.msra.mxu0 0.0
        %710 = vmatprep.subr.mxu0 0.0
        %711 = vmatpush2.msra.mxu0 0.0
        %712 = vmatprep.subr.mxu0 0.0
        %713 = vmatpush2.msra.mxu0 0.0
        %714 = vmatprep.subr.mxu0 0.0
        %715 = vmatpush2.msra.mxu0 0.0
        %716 = vmatprep.subr.mxu0 0.0
        %717 = vmatpush2.msra.mxu0 0.0
        %718 = vmatprep.subr.mxu0 0.0
        %719 = vmatpush2.msra.mxu0 0.0
        %720 = vmatprep.subr.mxu0 0.0
        %721 = vmatpush2.msra.mxu0 0.0
        %722 = vmatprep.subr.mxu0 0.0
        %723 = vmatpush2.msra.mxu0 0.0
        %724 = vmatprep.subr.mxu0 0.0
        %725 = vmatpush2.msra.mxu0 0.0
        %726 = vmatprep.subr.mxu0 0.0
        %727 = vmatpush2.msra.mxu0 0.0
        %728 = vmatprep.subr.mxu0 0.0
        %729 = vmatpush2.msra.mxu0 0.0
        %730 = vmatprep.subr.mxu0 0.0
        %731 = vmatpush2.msra.mxu0 0.0
        %732 = vmatprep.subr.mxu0 0.0
        %733 = vmatpush2.msra.mxu0 0.0
        %734 = vmatprep.subr.mxu0 0.0
        %735 = vmatpush2.msra.mxu0 0.0
        %736 = vmatprep.subr.mxu0 0.0
        %737 = vmatpush2.msra.mxu0 0.0
        %738 = vmatprep.mubr.f32.mxu0 0.0
        %739 = vmatmul.mubr.f32.gmra.mxu0 %v466
        %v740 = vpop.f32.mrf.mxu0
        %v741 = vadd.f32 0.0, %v740
        %v742 = vpop.f32.mrf.mxu0
        %v743 = vadd.f32 0.0, %v742
        %744 = vmatprep.mubr.f32.mxu0 0.0
        %745 = vmatmul.mubr.f32.gmra.mxu0 %v469
        %v746 = vpop.f32.mrf.mxu0
        %v747 = vadd.f32 0.0, %v746
        %v748 = vpop.f32.mrf.mxu0
        %v749 = vadd.f32 0.0, %v748
        %750 = vmatprep.mubr.f32.mxu0 0.0
        %751 = vmatmul.mubr.f32.gmra.mxu0 %v472
        %v752 = vpop.f32.mrf.mxu0
        %v753 = vadd.f32 0.0, %v752
        %v754 = vpop.f32.mrf.mxu0
        %v755 = vadd.f32 0.0, %v754
        %756 = vmatprep.mubr.f32.mxu0 0.0
        %757 = vmatmul.mubr.f32.gmra.mxu0 %v475
        %v758 = vpop.f32.mrf.mxu0
        %v759 = vadd.f32 0.0, %v758
        %v760 = vpop.f32.mrf.mxu0
        %v761 = vadd.f32 0.0, %v760
        %762 = vmatprep.mubr.f32.mxu0 0.0
        %763 = vmatmul.mubr.f32.gmra.mxu0 %v478
        %v764 = vpop.f32.mrf.mxu0
        %v765 = vadd.f32 0.0, %v764
        %v766 = vpop.f32.mrf.mxu0
        %v767 = vadd.f32 0.0, %v766
        %768 = vmatprep.mubr.f32.mxu0 0.0
        %769 = vmatmul.mubr.f32.gmra.mxu0 %v481
        %v770 = vpop.f32.mrf.mxu0
        %v771 = vadd.f32 0.0, %v770
        %v772 = vpop.f32.mrf.mxu0
        %v773 = vadd.f32 0.0, %v772
        %774 = vmatprep.mubr.f32.mxu0 0.0
        %775 = vmatmul.mubr.f32.gmra.mxu0 %v484
        %v776 = vpop.f32.mrf.mxu0
        %v777 = vadd.f32 0.0, %v776
        %v778 = vpop.f32.mrf.mxu0
        %v779 = vadd.f32 0.0, %v778
        %780 = vmatprep.mubr.f32.mxu0 0.0
        %781 = vmatmul.mubr.f32.gmra.mxu0 %v487
        %v782 = vpop.f32.mrf.mxu0
        %v783 = vadd.f32 0.0, %v782
        %v784 = vpop.f32.mrf.mxu0
        %v785 = vadd.f32 0.0, %v784
        %786 = vmatprep.mubr.f32.mxu0 0.0
        %787 = vmatmul.mubr.f32.gmra.mxu0 %v490
        %v788 = vpop.f32.mrf.mxu0
        %v789 = vadd.f32 0.0, %v788
        %v790 = vpop.f32.mrf.mxu0
        %v791 = vadd.f32 0.0, %v790
        %792 = vmatprep.mubr.f32.mxu0 0.0
        %793 = vmatmul.mubr.f32.gmra.mxu0 %v493
        %v794 = vpop.f32.mrf.mxu0
        %v795 = vadd.f32 0.0, %v794
        %v796 = vpop.f32.mrf.mxu0
        %v797 = vadd.f32 0.0, %v796
        %798 = vmatprep.mubr.f32.mxu0 0.0
        %799 = vmatmul.mubr.f32.gmra.mxu0 %v496
        %v800 = vpop.f32.mrf.mxu0
        %v801 = vadd.f32 0.0, %v800
        %v802 = vpop.f32.mrf.mxu0
        %v803 = vadd.f32 0.0, %v802
        %804 = vmatprep.mubr.f32.mxu0 0.0
        %805 = vmatmul.mubr.f32.gmra.mxu0 %v499
        %v806 = vpop.f32.mrf.mxu0
        %v807 = vadd.f32 0.0, %v806
        %v808 = vpop.f32.mrf.mxu0
        %v809 = vadd.f32 0.0, %v808
        %810 = vmatprep.mubr.f32.mxu0 0.0
        %811 = vmatmul.mubr.f32.gmra.mxu0 %v502
        %v812 = vpop.f32.mrf.mxu0
        %v813 = vadd.f32 0.0, %v812
        %v814 = vpop.f32.mrf.mxu0
        %v815 = vadd.f32 0.0, %v814
        %816 = vmatprep.mubr.f32.mxu0 0.0
        %817 = vmatmul.mubr.f32.gmra.mxu0 %v505
        %v818 = vpop.f32.mrf.mxu0
        %v819 = vadd.f32 0.0, %v818
        %v820 = vpop.f32.mrf.mxu0
        %v821 = vadd.f32 0.0, %v820
        %822 = vmatprep.mubr.f32.mxu0 0.0
        %823 = vmatmul.mubr.f32.gmra.mxu0 %v508
        %v824 = vpop.f32.mrf.mxu0
        %v825 = vadd.f32 0.0, %v824
        %v826 = vpop.f32.mrf.mxu0
        %v827 = vadd.f32 0.0, %v826
        %828 = vmatprep.mubr.f32.mxu0 0.0
        %829 = vmatmul.mubr.f32.gmra.mxu0 %v511
        %v830 = vpop.f32.mrf.mxu0
        %v831 = vadd.f32 0.0, %v830
        %v832 = vpop.f32.mrf.mxu0
        %v833 = vadd.f32 0.0, %v832
        %834 = vdwg.mxu0
        %v835 = vld [vmem:[%s400] sm:$0xff]
        %v836 = vld [vmem:[%s400 + $0x8] sm:$0xff]
        %v837 = vld [vmem:[%s400 + $0x10] sm:$0xff]
        %v838 = vld [vmem:[%s400 + $0x18] sm:$0xff]
        %v839 = vld [vmem:[%s400 + $0x20] sm:$0xff]
        %v840 = vld [vmem:[%s400 + $0x28] sm:$0xff]
        %v841 = vld [vmem:[%s400 + $0x30] sm:$0xff]
        %v842 = vld [vmem:[%s400 + $0x38] sm:$0xff]
        %v843 = vld [vmem:[%s400 + $0x40] sm:$0xff]
        %v844 = vld [vmem:[%s400 + $0x48] sm:$0xff]
        %v845 = vld [vmem:[%s400 + $0x50] sm:$0xff]
        %v846 = vld [vmem:[%s400 + $0x58] sm:$0xff]
        %v847 = vld [vmem:[%s400 + $0x60] sm:$0xff]
        %v848 = vld [vmem:[%s400 + $0x68] sm:$0xff]
        %v849 = vld [vmem:[%s400 + $0x70] sm:$0xff]
        %v850 = vld [vmem:[%s400 + $0x78] sm:$0xff]
        %v851 = vld [vmem:[%s405] sm:$0xf]
        %s852 = scalar_lea.vmem %s410, %s415
        %v853 = vld [vmem:[%s852] sm:$0xff]
        %v854 = vld [vmem:[%s852 + $0x8] sm:$0xff]
        %v855 = vld [vmem:[%s852 + $0x10] sm:$0xff]
        %v856 = vld [vmem:[%s852 + $0x18] sm:$0xff]
        %v857 = vld [vmem:[%s852 + $0x20] sm:$0xff]
        %v858 = vld [vmem:[%s852 + $0x28] sm:$0xff]
        %v859 = vld [vmem:[%s852 + $0x30] sm:$0xff]
        %v860 = vld [vmem:[%s852 + $0x38] sm:$0xff]
        %v861 = vld [vmem:[%s852 + $0x40] sm:$0xff]
        %v862 = vld [vmem:[%s852 + $0x48] sm:$0xff]
        %v863 = vld [vmem:[%s852 + $0x50] sm:$0xff]
        %v864 = vld [vmem:[%s852 + $0x58] sm:$0xff]
        %v865 = vld [vmem:[%s852 + $0x60] sm:$0xff]
        %v866 = vld [vmem:[%s852 + $0x68] sm:$0xff]
        %v867 = vld [vmem:[%s852 + $0x70] sm:$0xff]
        %v868 = vld [vmem:[%s852 + $0x78] sm:$0xff]
        %v869 = vld [vmem:[%s413] sm:$0x1]
        %871 = vset.pattern.permute.xlu0 0
        %872 = vperm.xlu0 %871, %v853
        %v873 = vpop.permute.xlu0 %872
        %876 = vset.pattern.permute.xlu0 0
        %877 = vperm.xlu0 %876, %v854
        %v878 = vpop.permute.xlu0 %877
        %881 = vset.pattern.permute.xlu0 0
        %882 = vperm.xlu0 %881, %v855
        %v883 = vpop.permute.xlu0 %882
        %886 = vset.pattern.permute.xlu0 0
        %887 = vperm.xlu0 %886, %v856
        %v888 = vpop.permute.xlu0 %887
        %891 = vset.pattern.permute.xlu0 0
        %892 = vperm.xlu0 %891, %v857
        %v893 = vpop.permute.xlu0 %892
        %896 = vset.pattern.permute.xlu0 0
        %897 = vperm.xlu0 %896, %v858
        %v898 = vpop.permute.xlu0 %897
        %901 = vset.pattern.permute.xlu0 0
        %902 = vperm.xlu0 %901, %v859
        %v903 = vpop.permute.xlu0 %902
        %906 = vset.pattern.permute.xlu0 0
        %907 = vperm.xlu0 %906, %v860
        %v908 = vpop.permute.xlu0 %907
        %911 = vset.pattern.permute.xlu0 0
        %912 = vperm.xlu0 %911, %v861
        %v913 = vpop.permute.xlu0 %912
        %916 = vset.pattern.permute.xlu0 0
        %917 = vperm.xlu0 %916, %v862
        %v918 = vpop.permute.xlu0 %917
        %921 = vset.pattern.permute.xlu0 0
        %922 = vperm.xlu0 %921, %v863
        %v923 = vpop.permute.xlu0 %922
        %926 = vset.pattern.permute.xlu0 0
        %927 = vperm.xlu0 %926, %v864
        %v928 = vpop.permute.xlu0 %927
        %931 = vset.pattern.permute.xlu0 0
        %932 = vperm.xlu0 %931, %v865
        %v933 = vpop.permute.xlu0 %932
        %936 = vset.pattern.permute.xlu0 0
        %937 = vperm.xlu0 %936, %v866
        %v938 = vpop.permute.xlu0 %937
        %941 = vset.pattern.permute.xlu0 0
        %942 = vperm.xlu0 %941, %v867
        %v943 = vpop.permute.xlu0 %942
        %946 = vset.pattern.permute.xlu0 0
        %947 = vperm.xlu0 %946, %v868
        %v948 = vpop.permute.xlu0 %947
        %v951 = vlaneseq
        %v952 = vshrl.u32 %v951, 7
        %v953 = vsub.s32 0, %v952
        %v954 = vrot.slane %v869, %v953
        %v956 = vmul.f32 %v873, %v954
        %v957 = vmul.f32 %v878, %v954
        %v958 = vmul.f32 %v883, %v954
        %v959 = vmul.f32 %v888, %v954
        %v960 = vmul.f32 %v893, %v954
        %v961 = vmul.f32 %v898, %v954
        %v962 = vmul.f32 %v903, %v954
        %v963 = vmul.f32 %v908, %v954
        %v964 = vmul.f32 %v913, %v954
        %v965 = vmul.f32 %v918, %v954
        %v966 = vmul.f32 %v923, %v954
        %v967 = vmul.f32 %v928, %v954
        %v968 = vmul.f32 %v933, %v954
        %v969 = vmul.f32 %v938, %v954
        %v970 = vmul.f32 %v943, %v954
        %v971 = vmul.f32 %v948, %v954
        %v972 = vlaneseq
        %v973 = vshrl.u32 %v972, 7
        %v974 = vadd.s32 %v973, 8
        %v975 = vadd.s32 %v973, 16
        %v976 = vadd.s32 %v973, 24
        %v977 = vadd.s32 %v973, 32
        %v978 = vadd.s32 %v973, 40
        %v979 = vadd.s32 %v973, 48
        %v980 = vadd.s32 %v973, 56
        %v981 = vadd.s32 %v973, 64
        %v982 = vadd.s32 %v973, 72
        %v983 = vadd.s32 %v973, 80
        %v984 = vadd.s32 %v973, 88
        %v985 = vadd.s32 %v973, 96
        %v986 = vadd.s32 %v973, 104
        %v987 = vadd.s32 %v973, 112
        %v988 = vadd.s32 %v973, 120
        %v989 = vstv %s415
        %v990 = vadd.s32 %v973, %v989
        %v991 = vadd.s32 %v974, %v989
        %v992 = vadd.s32 %v975, %v989
        %v993 = vadd.s32 %v976, %v989
        %v994 = vadd.s32 %v977, %v989
        %v995 = vadd.s32 %v978, %v989
        %v996 = vadd.s32 %v979, %v989
        %v997 = vadd.s32 %v980, %v989
        %v998 = vadd.s32 %v981, %v989
        %v999 = vadd.s32 %v982, %v989
        %v1000 = vadd.s32 %v983, %v989
        %v1001 = vadd.s32 %v984, %v989
        %v1002 = vadd.s32 %v985, %v989
        %v1003 = vadd.s32 %v986, %v989
        %v1004 = vadd.s32 %v987, %v989
        %v1005 = vadd.s32 %v988, %v989
        %v1006 = vlaneseq
        %v1007 = vand.u32 %v1006, 127
        %vm1008 = vcmp.gt.s32.totalorder %v990, %v1007
        %vm1009 = vcmp.gt.s32.totalorder %v991, %v1007
        %vm1010 = vcmp.gt.s32.totalorder %v992, %v1007
        %vm1011 = vcmp.gt.s32.totalorder %v993, %v1007
        %vm1012 = vcmp.gt.s32.totalorder %v994, %v1007
        %vm1013 = vcmp.gt.s32.totalorder %v995, %v1007
        %vm1014 = vcmp.gt.s32.totalorder %v996, %v1007
        %vm1015 = vcmp.gt.s32.totalorder %v997, %v1007
        %vm1016 = vcmp.gt.s32.totalorder %v998, %v1007
        %vm1017 = vcmp.gt.s32.totalorder %v999, %v1007
        %vm1018 = vcmp.gt.s32.totalorder %v1000, %v1007
        %vm1019 = vcmp.gt.s32.totalorder %v1001, %v1007
        %vm1020 = vcmp.gt.s32.totalorder %v1002, %v1007
        %vm1021 = vcmp.gt.s32.totalorder %v1003, %v1007
        %vm1022 = vcmp.gt.s32.totalorder %v1004, %v1007
        %vm1023 = vcmp.gt.s32.totalorder %v1005, %v1007
        %v1024 = vsel %vm1008, 1, 0
        %v1025 = vsel %vm1009, 1, 0
        %v1026 = vsel %vm1010, 1, 0
        %v1027 = vsel %vm1011, 1, 0
        %v1028 = vsel %vm1012, 1, 0
        %v1029 = vsel %vm1013, 1, 0
        %v1030 = vsel %vm1014, 1, 0
        %v1031 = vsel %vm1015, 1, 0
        %v1032 = vsel %vm1016, 1, 0
        %v1033 = vsel %vm1017, 1, 0
        %v1034 = vsel %vm1018, 1, 0
        %v1035 = vsel %vm1019, 1, 0
        %v1036 = vsel %vm1020, 1, 0
        %v1037 = vsel %vm1021, 1, 0
        %v1038 = vsel %vm1022, 1, 0
        %v1039 = vsel %vm1023, 1, 0
        %v1040 = vcvt.s32.f32 %v1024
        %v1041 = vcvt.s32.f32 %v1025
        %v1042 = vcvt.s32.f32 %v1026
        %v1043 = vcvt.s32.f32 %v1027
        %v1044 = vcvt.s32.f32 %v1028
        %v1045 = vcvt.s32.f32 %v1029
        %v1046 = vcvt.s32.f32 %v1030
        %v1047 = vcvt.s32.f32 %v1031
        %v1048 = vcvt.s32.f32 %v1032
        %v1049 = vcvt.s32.f32 %v1033
        %v1050 = vcvt.s32.f32 %v1034
        %v1051 = vcvt.s32.f32 %v1035
        %v1052 = vcvt.s32.f32 %v1036
        %v1053 = vcvt.s32.f32 %v1037
        %v1054 = vcvt.s32.f32 %v1038
        %v1055 = vcvt.s32.f32 %v1039
        %v1056 = vsub.f32 1.0, %v853
        %v1057 = vsub.f32 1.0, %v854
        %v1058 = vsub.f32 1.0, %v855
        %v1059 = vsub.f32 1.0, %v856
        %v1060 = vsub.f32 1.0, %v857
        %v1061 = vsub.f32 1.0, %v858
        %v1062 = vsub.f32 1.0, %v859
        %v1063 = vsub.f32 1.0, %v860
        %v1064 = vsub.f32 1.0, %v861
        %v1065 = vsub.f32 1.0, %v862
        %v1066 = vsub.f32 1.0, %v863
        %v1067 = vsub.f32 1.0, %v864
        %v1068 = vsub.f32 1.0, %v865
        %v1069 = vsub.f32 1.0, %v866
        %v1070 = vsub.f32 1.0, %v867
        %v1071 = vsub.f32 1.0, %v868
        %1073 = vset.pattern.permute.xlu0 0
        %1074 = vperm.xlu0 %1073, %v1056
        %v1075 = vpop.permute.xlu0 %1074
        %1078 = vset.pattern.permute.xlu0 0
        %1079 = vperm.xlu0 %1078, %v1057
        %v1080 = vpop.permute.xlu0 %1079
        %1083 = vset.pattern.permute.xlu0 0
        %1084 = vperm.xlu0 %1083, %v1058
        %v1085 = vpop.permute.xlu0 %1084
        %1088 = vset.pattern.permute.xlu0 0
        %1089 = vperm.xlu0 %1088, %v1059
        %v1090 = vpop.permute.xlu0 %1089
        %1093 = vset.pattern.permute.xlu0 0
        %1094 = vperm.xlu0 %1093, %v1060
        %v1095 = vpop.permute.xlu0 %1094
        %1098 = vset.pattern.permute.xlu0 0
        %1099 = vperm.xlu0 %1098, %v1061
        %v1100 = vpop.permute.xlu0 %1099
        %1103 = vset.pattern.permute.xlu0 0
        %1104 = vperm.xlu0 %1103, %v1062
        %v1105 = vpop.permute.xlu0 %1104
        %1108 = vset.pattern.permute.xlu0 0
        %1109 = vperm.xlu0 %1108, %v1063
        %v1110 = vpop.permute.xlu0 %1109
        %1113 = vset.pattern.permute.xlu0 0
        %1114 = vperm.xlu0 %1113, %v1064
        %v1115 = vpop.permute.xlu0 %1114
        %1118 = vset.pattern.permute.xlu0 0
        %1119 = vperm.xlu0 %1118, %v1065
        %v1120 = vpop.permute.xlu0 %1119
        %1123 = vset.pattern.permute.xlu0 0
        %1124 = vperm.xlu0 %1123, %v1066
        %v1125 = vpop.permute.xlu0 %1124
        %1128 = vset.pattern.permute.xlu0 0
        %1129 = vperm.xlu0 %1128, %v1067
        %v1130 = vpop.permute.xlu0 %1129
        %1133 = vset.pattern.permute.xlu0 0
        %1134 = vperm.xlu0 %1133, %v1068
        %v1135 = vpop.permute.xlu0 %1134
        %1138 = vset.pattern.permute.xlu0 0
        %1139 = vperm.xlu0 %1138, %v1069
        %v1140 = vpop.permute.xlu0 %1139
        %1143 = vset.pattern.permute.xlu0 0
        %1144 = vperm.xlu0 %1143, %v1070
        %v1145 = vpop.permute.xlu0 %1144
        %1148 = vset.pattern.permute.xlu0 0
        %1149 = vperm.xlu0 %1148, %v1071
        %v1150 = vpop.permute.xlu0 %1149
        %v1152 = vmul.f32 %v1075, %v954
        %v1153 = vmul.f32 %v1080, %v954
        %v1154 = vmul.f32 %v1085, %v954
        %v1155 = vmul.f32 %v1090, %v954
        %v1156 = vmul.f32 %v1095, %v954
        %v1157 = vmul.f32 %v1100, %v954
        %v1158 = vmul.f32 %v1105, %v954
        %v1159 = vmul.f32 %v1110, %v954
        %v1160 = vmul.f32 %v1115, %v954
        %v1161 = vmul.f32 %v1120, %v954
        %v1162 = vmul.f32 %v1125, %v954
        %v1163 = vmul.f32 %v1130, %v954
        %v1164 = vmul.f32 %v1135, %v954
        %v1165 = vmul.f32 %v1140, %v954
        %v1166 = vmul.f32 %v1145, %v954
        %v1167 = vmul.f32 %v1150, %v954
        %v1168 = vsub.f32 1.0, %v869
        %v1170 = vlaneseq
        %v1171 = vshrl.u32 %v1170, 7
        %v1172 = vsub.s32 0, %v1171
        %v1173 = vrot.slane %v1168, %v1172
        %v1175 = vadd.f32 %v1152, %v1173
        %v1176 = vadd.f32 %v1153, %v1173
        %v1177 = vadd.f32 %v1154, %v1173
        %v1178 = vadd.f32 %v1155, %v1173
        %v1179 = vadd.f32 %v1156, %v1173
        %v1180 = vadd.f32 %v1157, %v1173
        %v1181 = vadd.f32 %v1158, %v1173
        %v1182 = vadd.f32 %v1159, %v1173
        %v1183 = vadd.f32 %v1160, %v1173
        %v1184 = vadd.f32 %v1161, %v1173
        %v1185 = vadd.f32 %v1162, %v1173
        %v1186 = vadd.f32 %v1163, %v1173
        %v1187 = vadd.f32 %v1164, %v1173
        %v1188 = vadd.f32 %v1165, %v1173
        %v1189 = vadd.f32 %v1166, %v1173
        %v1190 = vadd.f32 %v1167, %v1173
        %v1191 = vmul.f32 %v1175, -1e+12
        %v1192 = vmul.f32 %v1176, -1e+12
        %v1193 = vmul.f32 %v1177, -1e+12
        %v1194 = vmul.f32 %v1178, -1e+12
        %v1195 = vmul.f32 %v1179, -1e+12
        %v1196 = vmul.f32 %v1180, -1e+12
        %v1197 = vmul.f32 %v1181, -1e+12
        %v1198 = vmul.f32 %v1182, -1e+12
        %v1199 = vmul.f32 %v1183, -1e+12
        %v1200 = vmul.f32 %v1184, -1e+12
        %v1201 = vmul.f32 %v1185, -1e+12
        %v1202 = vmul.f32 %v1186, -1e+12
        %v1203 = vmul.f32 %v1187, -1e+12
        %v1204 = vmul.f32 %v1188, -1e+12
        %v1205 = vmul.f32 %v1189, -1e+12
        %v1206 = vmul.f32 %v1190, -1e+12
        %v1207 = vmul.f32 %v1040, 1e+12
        %v1208 = vmul.f32 %v1041, 1e+12
        %v1209 = vmul.f32 %v1042, 1e+12
        %v1210 = vmul.f32 %v1043, 1e+12
        %v1211 = vmul.f32 %v1044, 1e+12
        %v1212 = vmul.f32 %v1045, 1e+12
        %v1213 = vmul.f32 %v1046, 1e+12
        %v1214 = vmul.f32 %v1047, 1e+12
        %v1215 = vmul.f32 %v1048, 1e+12
        %v1216 = vmul.f32 %v1049, 1e+12
        %v1217 = vmul.f32 %v1050, 1e+12
        %v1218 = vmul.f32 %v1051, 1e+12
        %v1219 = vmul.f32 %v1052, 1e+12
        %v1220 = vmul.f32 %v1053, 1e+12
        %v1221 = vmul.f32 %v1054, 1e+12
        %v1222 = vmul.f32 %v1055, 1e+12
        %v1223 = vsub.f32 %v1191, %v1207
        %v1224 = vsub.f32 %v1192, %v1208
        %v1225 = vsub.f32 %v1193, %v1209
        %v1226 = vsub.f32 %v1194, %v1210
        %v1227 = vsub.f32 %v1195, %v1211
        %v1228 = vsub.f32 %v1196, %v1212
        %v1229 = vsub.f32 %v1197, %v1213
        %v1230 = vsub.f32 %v1198, %v1214
        %v1231 = vsub.f32 %v1199, %v1215
        %v1232 = vsub.f32 %v1200, %v1216
        %v1233 = vsub.f32 %v1201, %v1217
        %v1234 = vsub.f32 %v1202, %v1218
        %v1235 = vsub.f32 %v1203, %v1219
        %v1236 = vsub.f32 %v1204, %v1220
        %v1237 = vsub.f32 %v1205, %v1221
        %v1238 = vsub.f32 %v1206, %v1222
        %1240 = vset.pattern.permute.xlu0 0
        %1241 = vperm.xlu0 %1240, %v835
        %v1242 = vpop.permute.xlu0 %1241
        %1245 = vset.pattern.permute.xlu0 0
        %1246 = vperm.xlu0 %1245, %v836
        %v1247 = vpop.permute.xlu0 %1246
        %1250 = vset.pattern.permute.xlu0 0
        %1251 = vperm.xlu0 %1250, %v837
        %v1252 = vpop.permute.xlu0 %1251
        %1255 = vset.pattern.permute.xlu0 0
        %1256 = vperm.xlu0 %1255, %v838
        %v1257 = vpop.permute.xlu0 %1256
        %1260 = vset.pattern.permute.xlu0 0
        %1261 = vperm.xlu0 %1260, %v839
        %v1262 = vpop.permute.xlu0 %1261
        %1265 = vset.pattern.permute.xlu0 0
        %1266 = vperm.xlu0 %1265, %v840
        %v1267 = vpop.permute.xlu0 %1266
        %1270 = vset.pattern.permute.xlu0 0
        %1271 = vperm.xlu0 %1270, %v841
        %v1272 = vpop.permute.xlu0 %1271
        %1275 = vset.pattern.permute.xlu0 0
        %1276 = vperm.xlu0 %1275, %v842
        %v1277 = vpop.permute.xlu0 %1276
        %1280 = vset.pattern.permute.xlu0 0
        %1281 = vperm.xlu0 %1280, %v843
        %v1282 = vpop.permute.xlu0 %1281
        %1285 = vset.pattern.permute.xlu0 0
        %1286 = vperm.xlu0 %1285, %v844
        %v1287 = vpop.permute.xlu0 %1286
        %1290 = vset.pattern.permute.xlu0 0
        %1291 = vperm.xlu0 %1290, %v845
        %v1292 = vpop.permute.xlu0 %1291
        %1295 = vset.pattern.permute.xlu0 0
        %1296 = vperm.xlu0 %1295, %v846
        %v1297 = vpop.permute.xlu0 %1296
        %1300 = vset.pattern.permute.xlu0 0
        %1301 = vperm.xlu0 %1300, %v847
        %v1302 = vpop.permute.xlu0 %1301
        %1305 = vset.pattern.permute.xlu0 0
        %1306 = vperm.xlu0 %1305, %v848
        %v1307 = vpop.permute.xlu0 %1306
        %1310 = vset.pattern.permute.xlu0 0
        %1311 = vperm.xlu0 %1310, %v849
        %v1312 = vpop.permute.xlu0 %1311
        %1315 = vset.pattern.permute.xlu0 0
        %1316 = vperm.xlu0 %1315, %v850
        %v1317 = vpop.permute.xlu0 %1316
        %1319 = vmatprep.subr.mxu0 0.0
        %1320 = vmatpush1.msra.mxu0 %v447
        %1321 = vmatprep.subr.mxu0 0.0
        %1322 = vmatpush1.msra.mxu0 %v446
        %1323 = vmatprep.subr.mxu0 0.0
        %1324 = vmatpush1.msra.mxu0 %v445
        %1325 = vmatprep.subr.mxu0 0.0
        %1326 = vmatpush1.msra.mxu0 %v444
        %1327 = vmatprep.subr.mxu0 0.0
        %1328 = vmatpush1.msra.mxu0 %v443
        %1329 = vmatprep.subr.mxu0 0.0
        %1330 = vmatpush1.msra.mxu0 %v442
        %1331 = vmatprep.subr.mxu0 0.0
        %1332 = vmatpush1.msra.mxu0 %v441
        %1333 = vmatprep.subr.mxu0 0.0
        %1334 = vmatpush1.msra.mxu0 %v440
        %1335 = vmatprep.subr.mxu0 0.0
        %1336 = vmatpush1.msra.mxu0 %v439
        %1337 = vmatprep.subr.mxu0 0.0
        %1338 = vmatpush1.msra.mxu0 %v438
        %1339 = vmatprep.subr.mxu0 0.0
        %1340 = vmatpush1.msra.mxu0 %v437
        %1341 = vmatprep.subr.mxu0 0.0
        %1342 = vmatpush1.msra.mxu0 %v436
        %1343 = vmatprep.subr.mxu0 0.0
        %1344 = vmatpush1.msra.mxu0 %v435
        %1345 = vmatprep.subr.mxu0 0.0
        %1346 = vmatpush1.msra.mxu0 %v434
        %1347 = vmatprep.subr.mxu0 0.0
        %1348 = vmatpush1.msra.mxu0 %v433
        %1349 = vmatprep.subr.mxu0 0.0
        %1350 = vmatpush1.msra.mxu0 %v432
        %1351 = vmatprep.subr.mxu0 0.0
        %1352 = vmatpush2.msra.mxu0 0.0
        %1353 = vmatprep.subr.mxu0 0.0
        %1354 = vmatpush2.msra.mxu0 0.0
        %1355 = vmatprep.subr.mxu0 0.0
        %1356 = vmatpush2.msra.mxu0 0.0
        %1357 = vmatprep.subr.mxu0 0.0
        %1358 = vmatpush2.msra.mxu0 0.0
        %1359 = vmatprep.subr.mxu0 0.0
        %1360 = vmatpush2.msra.mxu0 0.0
        %1361 = vmatprep.subr.mxu0 0.0
        %1362 = vmatpush2.msra.mxu0 0.0
        %1363 = vmatprep.subr.mxu0 0.0
        %1364 = vmatpush2.msra.mxu0 0.0
        %1365 = vmatprep.subr.mxu0 0.0
        %1366 = vmatpush2.msra.mxu0 0.0
        %1367 = vmatprep.subr.mxu0 0.0
        %1368 = vmatpush2.msra.mxu0 0.0
        %1369 = vmatprep.subr.mxu0 0.0
        %1370 = vmatpush2.msra.mxu0 0.0
        %1371 = vmatprep.subr.mxu0 0.0
        %1372 = vmatpush2.msra.mxu0 0.0
        %1373 = vmatprep.subr.mxu0 0.0
        %1374 = vmatpush2.msra.mxu0 0.0
        %1375 = vmatprep.subr.mxu0 0.0
        %1376 = vmatpush2.msra.mxu0 0.0
        %1377 = vmatprep.subr.mxu0 0.0
        %1378 = vmatpush2.msra.mxu0 0.0
        %1379 = vmatprep.subr.mxu0 0.0
        %1380 = vmatpush2.msra.mxu0 0.0
        %1381 = vmatprep.subr.mxu0 0.0
        %1382 = vmatpush2.msra.mxu0 0.0
        %1383 = vmatprep.mubr.f32.mxu0 0.0
        %1384 = vmatmul.mubr.f32.gmra.mxu0 %v580
        %v1385 = vpop.f32.mrf.mxu0
        %v1386 = vadd.f32 %v1242, %v1385
        %v1387 = vpop.f32.mrf.mxu0
        %1388 = vmatprep.mubr.f32.mxu0 0.0
        %1389 = vmatmul.mubr.f32.gmra.mxu0 %v586
        %v1390 = vpop.f32.mrf.mxu0
        %v1391 = vadd.f32 %v1247, %v1390
        %v1392 = vpop.f32.mrf.mxu0
        %1393 = vmatprep.mubr.f32.mxu0 0.0
        %1394 = vmatmul.mubr.f32.gmra.mxu0 %v592
        %v1395 = vpop.f32.mrf.mxu0
        %v1396 = vadd.f32 %v1252, %v1395
        %v1397 = vpop.f32.mrf.mxu0
        %1398 = vmatprep.mubr.f32.mxu0 0.0
        %1399 = vmatmul.mubr.f32.gmra.mxu0 %v598
        %v1400 = vpop.f32.mrf.mxu0
        %v1401 = vadd.f32 %v1257, %v1400
        %v1402 = vpop.f32.mrf.mxu0
        %1403 = vmatprep.mubr.f32.mxu0 0.0
        %1404 = vmatmul.mubr.f32.gmra.mxu0 %v604
        %v1405 = vpop.f32.mrf.mxu0
        %v1406 = vadd.f32 %v1262, %v1405
        %v1407 = vpop.f32.mrf.mxu0
        %1408 = vmatprep.mubr.f32.mxu0 0.0
        %1409 = vmatmul.mubr.f32.gmra.mxu0 %v610
        %v1410 = vpop.f32.mrf.mxu0
        %v1411 = vadd.f32 %v1267, %v1410
        %v1412 = vpop.f32.mrf.mxu0
        %1413 = vmatprep.mubr.f32.mxu0 0.0
        %1414 = vmatmul.mubr.f32.gmra.mxu0 %v616
        %v1415 = vpop.f32.mrf.mxu0
        %v1416 = vadd.f32 %v1272, %v1415
        %v1417 = vpop.f32.mrf.mxu0
        %1418 = vmatprep.mubr.f32.mxu0 0.0
        %1419 = vmatmul.mubr.f32.gmra.mxu0 %v622
        %v1420 = vpop.f32.mrf.mxu0
        %v1421 = vadd.f32 %v1277, %v1420
        %v1422 = vpop.f32.mrf.mxu0
        %1423 = vmatprep.mubr.f32.mxu0 0.0
        %1424 = vmatmul.mubr.f32.gmra.mxu0 %v628
        %v1425 = vpop.f32.mrf.mxu0
        %v1426 = vadd.f32 %v1282, %v1425
        %v1427 = vpop.f32.mrf.mxu0
        %1428 = vmatprep.mubr.f32.mxu0 0.0
        %1429 = vmatmul.mubr.f32.gmra.mxu0 %v634
        %v1430 = vpop.f32.mrf.mxu0
        %v1431 = vadd.f32 %v1287, %v1430
        %v1432 = vpop.f32.mrf.mxu0
        %1433 = vmatprep.mubr.f32.mxu0 0.0
        %1434 = vmatmul.mubr.f32.gmra.mxu0 %v640
        %v1435 = vpop.f32.mrf.mxu0
        %v1436 = vadd.f32 %v1292, %v1435
        %v1437 = vpop.f32.mrf.mxu0
        %1438 = vmatprep.mubr.f32.mxu0 0.0
        %1439 = vmatmul.mubr.f32.gmra.mxu0 %v646
        %v1440 = vpop.f32.mrf.mxu0
        %v1441 = vadd.f32 %v1297, %v1440
        %v1442 = vpop.f32.mrf.mxu0
        %1443 = vmatprep.mubr.f32.mxu0 0.0
        %1444 = vmatmul.mubr.f32.gmra.mxu0 %v652
        %v1445 = vpop.f32.mrf.mxu0
        %v1446 = vadd.f32 %v1302, %v1445
        %v1447 = vpop.f32.mrf.mxu0
        %1448 = vmatprep.mubr.f32.mxu0 0.0
        %1449 = vmatmul.mubr.f32.gmra.mxu0 %v658
        %v1450 = vpop.f32.mrf.mxu0
        %v1451 = vadd.f32 %v1307, %v1450
        %v1452 = vpop.f32.mrf.mxu0
        %1453 = vmatprep.mubr.f32.mxu0 0.0
        %1454 = vmatmul.mubr.f32.gmra.mxu0 %v664
        %v1455 = vpop.f32.mrf.mxu0
        %v1456 = vadd.f32 %v1312, %v1455
        %v1457 = vpop.f32.mrf.mxu0
        %1458 = vmatprep.mubr.f32.mxu0 0.0
        %1459 = vmatmul.mubr.f32.gmra.mxu0 %v670
        %v1460 = vpop.f32.mrf.mxu0
        %v1461 = vadd.f32 %v1317, %v1460
        %v1462 = vpop.f32.mrf.mxu0
        %1463 = vdwg.mxu0
        %v1464 = vlaneseq
        %v1465 = vshrl.u32 %v1464, 7
        %v1466 = vsub.s32 0, %v1465
        %v1467 = vrot.slane %v851, %v1466
        %v1468 = vadd.f32 %v1386, %v1467
        %v1469 = vadd.f32 %v1391, %v1467
        %v1470 = vadd.f32 %v1396, %v1467
        %v1471 = vadd.f32 %v1401, %v1467
        %v1472 = vadd.f32 %v1406, %v1467
        %v1473 = vadd.f32 %v1411, %v1467
        %v1474 = vadd.f32 %v1416, %v1467
        %v1475 = vadd.f32 %v1421, %v1467
        %v1476 = vadd.f32 %v1426, %v1467
        %v1477 = vadd.f32 %v1431, %v1467
        %v1478 = vadd.f32 %v1436, %v1467
        %v1479 = vadd.f32 %v1441, %v1467
        %v1480 = vadd.f32 %v1446, %v1467
        %v1481 = vadd.f32 %v1451, %v1467
        %v1482 = vadd.f32 %v1456, %v1467
        %v1483 = vadd.f32 %v1461, %v1467
        %v1484 = vmul.f32 %v1468, %v956
        %v1485 = vmul.f32 %v1469, %v957
        %v1486 = vmul.f32 %v1470, %v958
        %v1487 = vmul.f32 %v1471, %v959
        %v1488 = vmul.f32 %v1472, %v960
        %v1489 = vmul.f32 %v1473, %v961
        %v1490 = vmul.f32 %v1474, %v962
        %v1491 = vmul.f32 %v1475, %v963
        %v1492 = vmul.f32 %v1476, %v964
        %v1493 = vmul.f32 %v1477, %v965
        %v1494 = vmul.f32 %v1478, %v966
        %v1495 = vmul.f32 %v1479, %v967
        %v1496 = vmul.f32 %v1480, %v968
        %v1497 = vmul.f32 %v1481, %v969
        %v1498 = vmul.f32 %v1482, %v970
        %v1499 = vmul.f32 %v1483, %v971
        %v1500 = vadd.f32 %v1484, %v1223
        %v1501 = vadd.f32 %v1485, %v1224
        %v1502 = vadd.f32 %v1486, %v1225
        %v1503 = vadd.f32 %v1487, %v1226
        %v1504 = vadd.f32 %v1488, %v1227
        %v1505 = vadd.f32 %v1489, %v1228
        %v1506 = vadd.f32 %v1490, %v1229
        %v1507 = vadd.f32 %v1491, %v1230
        %v1508 = vadd.f32 %v1492, %v1231
        %v1509 = vadd.f32 %v1493, %v1232
        %v1510 = vadd.f32 %v1494, %v1233
        %v1511 = vadd.f32 %v1495, %v1234
        %v1512 = vadd.f32 %v1496, %v1235
        %v1513 = vadd.f32 %v1497, %v1236
        %v1514 = vadd.f32 %v1498, %v1237
        %v1515 = vadd.f32 %v1499, %v1238
        %1516 = vst [vmem:[%s376] sm:$0xff] %v1500
        %1517 = vst [vmem:[%s376 + $0x8] sm:$0xff] %v1501
        %1518 = vst [vmem:[%s376 + $0x10] sm:$0xff] %v1502
        %1519 = vst [vmem:[%s376 + $0x18] sm:$0xff] %v1503
        %1520 = vst [vmem:[%s376 + $0x20] sm:$0xff] %v1504
        %1521 = vst [vmem:[%s376 + $0x28] sm:$0xff] %v1505
        %1522 = vst [vmem:[%s376 + $0x30] sm:$0xff] %v1506
        %1523 = vst [vmem:[%s376 + $0x38] sm:$0xff] %v1507
        %1524 = vst [vmem:[%s376 + $0x40] sm:$0xff] %v1508
        %1525 = vst [vmem:[%s376 + $0x48] sm:$0xff] %v1509
        %1526 = vst [vmem:[%s376 + $0x50] sm:$0xff] %v1510
        %1527 = vst [vmem:[%s376 + $0x58] sm:$0xff] %v1511
        %1528 = vst [vmem:[%s376 + $0x60] sm:$0xff] %v1512
        %1529 = vst [vmem:[%s376 + $0x68] sm:$0xff] %v1513
        %1530 = vst [vmem:[%s376 + $0x70] sm:$0xff] %v1514
        %1531 = vst [vmem:[%s376 + $0x78] sm:$0xff] %v1515
        %1532 = vset.pattern.permute.xlu0 1
        %1533 = vperm.xlu0 %1532, %v835
        %v1534 = vpop.permute.xlu0 %1533
        %1536 = vset.pattern.permute.xlu0 1
        %1537 = vperm.xlu0 %1536, %v836
        %v1538 = vpop.permute.xlu0 %1537
        %1540 = vset.pattern.permute.xlu0 1
        %1541 = vperm.xlu0 %1540, %v837
        %v1542 = vpop.permute.xlu0 %1541
        %1544 = vset.pattern.permute.xlu0 1
        %1545 = vperm.xlu0 %1544, %v838
        %v1546 = vpop.permute.xlu0 %1545
        %1548 = vset.pattern.permute.xlu0 1
        %1549 = vperm.xlu0 %1548, %v839
        %v1550 = vpop.permute.xlu0 %1549
        %1552 = vset.pattern.permute.xlu0 1
        %1553 = vperm.xlu0 %1552, %v840
        %v1554 = vpop.permute.xlu0 %1553
        %1556 = vset.pattern.permute.xlu0 1
        %1557 = vperm.xlu0 %1556, %v841
        %v1558 = vpop.permute.xlu0 %1557
        %1560 = vset.pattern.permute.xlu0 1
        %1561 = vperm.xlu0 %1560, %v842
        %v1562 = vpop.permute.xlu0 %1561
        %1564 = vset.pattern.permute.xlu0 1
        %1565 = vperm.xlu0 %1564, %v843
        %v1566 = vpop.permute.xlu0 %1565
        %1568 = vset.pattern.permute.xlu0 1
        %1569 = vperm.xlu0 %1568, %v844
        %v1570 = vpop.permute.xlu0 %1569
        %1572 = vset.pattern.permute.xlu0 1
        %1573 = vperm.xlu0 %1572, %v845
        %v1574 = vpop.permute.xlu0 %1573
        %1576 = vset.pattern.permute.xlu0 1
        %1577 = vperm.xlu0 %1576, %v846
        %v1578 = vpop.permute.xlu0 %1577
        %1580 = vset.pattern.permute.xlu0 1
        %1581 = vperm.xlu0 %1580, %v847
        %v1582 = vpop.permute.xlu0 %1581
        %1584 = vset.pattern.permute.xlu0 1
        %1585 = vperm.xlu0 %1584, %v848
        %v1586 = vpop.permute.xlu0 %1585
        %1588 = vset.pattern.permute.xlu0 1
        %1589 = vperm.xlu0 %1588, %v849
        %v1590 = vpop.permute.xlu0 %1589
        %1592 = vset.pattern.permute.xlu0 1
        %1593 = vperm.xlu0 %1592, %v850
        %v1594 = vpop.permute.xlu0 %1593
        %1596 = vmatprep.subr.mxu0 0.0
        %1597 = vmatpush1.msra.mxu0 %v447
        %1598 = vmatprep.subr.mxu0 0.0
        %1599 = vmatpush1.msra.mxu0 %v446
        %1600 = vmatprep.subr.mxu0 0.0
        %1601 = vmatpush1.msra.mxu0 %v445
        %1602 = vmatprep.subr.mxu0 0.0
        %1603 = vmatpush1.msra.mxu0 %v444
        %1604 = vmatprep.subr.mxu0 0.0
        %1605 = vmatpush1.msra.mxu0 %v443
        %1606 = vmatprep.subr.mxu0 0.0
        %1607 = vmatpush1.msra.mxu0 %v442
        %1608 = vmatprep.subr.mxu0 0.0
        %1609 = vmatpush1.msra.mxu0 %v441
        %1610 = vmatprep.subr.mxu0 0.0
        %1611 = vmatpush1.msra.mxu0 %v440
        %1612 = vmatprep.subr.mxu0 0.0
        %1613 = vmatpush1.msra.mxu0 %v439
        %1614 = vmatprep.subr.mxu0 0.0
        %1615 = vmatpush1.msra.mxu0 %v438
        %1616 = vmatprep.subr.mxu0 0.0
        %1617 = vmatpush1.msra.mxu0 %v437
        %1618 = vmatprep.subr.mxu0 0.0
        %1619 = vmatpush1.msra.mxu0 %v436
        %1620 = vmatprep.subr.mxu0 0.0
        %1621 = vmatpush1.msra.mxu0 %v435
        %1622 = vmatprep.subr.mxu0 0.0
        %1623 = vmatpush1.msra.mxu0 %v434
        %1624 = vmatprep.subr.mxu0 0.0
        %1625 = vmatpush1.msra.mxu0 %v433
        %1626 = vmatprep.subr.mxu0 0.0
        %1627 = vmatpush1.msra.mxu0 %v432
        %1628 = vmatprep.subr.mxu0 0.0
        %1629 = vmatpush2.msra.mxu0 0.0
        %1630 = vmatprep.subr.mxu0 0.0
        %1631 = vmatpush2.msra.mxu0 0.0
        %1632 = vmatprep.subr.mxu0 0.0
        %1633 = vmatpush2.msra.mxu0 0.0
        %1634 = vmatprep.subr.mxu0 0.0
        %1635 = vmatpush2.msra.mxu0 0.0
        %1636 = vmatprep.subr.mxu0 0.0
        %1637 = vmatpush2.msra.mxu0 0.0
        %1638 = vmatprep.subr.mxu0 0.0
        %1639 = vmatpush2.msra.mxu0 0.0
        %1640 = vmatprep.subr.mxu0 0.0
        %1641 = vmatpush2.msra.mxu0 0.0
        %1642 = vmatprep.subr.mxu0 0.0
        %1643 = vmatpush2.msra.mxu0 0.0
        %1644 = vmatprep.subr.mxu0 0.0
        %1645 = vmatpush2.msra.mxu0 0.0
        %1646 = vmatprep.subr.mxu0 0.0
        %1647 = vmatpush2.msra.mxu0 0.0
        %1648 = vmatprep.subr.mxu0 0.0
        %1649 = vmatpush2.msra.mxu0 0.0
        %1650 = vmatprep.subr.mxu0 0.0
        %1651 = vmatpush2.msra.mxu0 0.0
        %1652 = vmatprep.subr.mxu0 0.0
        %1653 = vmatpush2.msra.mxu0 0.0
        %1654 = vmatprep.subr.mxu0 0.0
        %1655 = vmatpush2.msra.mxu0 0.0
        %1656 = vmatprep.subr.mxu0 0.0
        %1657 = vmatpush2.msra.mxu0 0.0
        %1658 = vmatprep.subr.mxu0 0.0
        %1659 = vmatpush2.msra.mxu0 0.0
        %1660 = vmatprep.mubr.f32.mxu0 0.0
        %1661 = vmatmul.mubr.f32.gmra.mxu0 %v582
        %v1662 = vpop.f32.mrf.mxu0
        %v1663 = vadd.f32 %v1534, %v1662
        %v1664 = vpop.f32.mrf.mxu0
        %1665 = vmatprep.mubr.f32.mxu0 0.0
        %1666 = vmatmul.mubr.f32.gmra.mxu0 %v588
        %v1667 = vpop.f32.mrf.mxu0
        %v1668 = vadd.f32 %v1538, %v1667
        %v1669 = vpop.f32.mrf.mxu0
        %1670 = vmatprep.mubr.f32.mxu0 0.0
        %1671 = vmatmul.mubr.f32.gmra.mxu0 %v594
        %v1672 = vpop.f32.mrf.mxu0
        %v1673 = vadd.f32 %v1542, %v1672
        %v1674 = vpop.f32.mrf.mxu0
        %1675 = vmatprep.mubr.f32.mxu0 0.0
        %1676 = vmatmul.mubr.f32.gmra.mxu0 %v600
        %v1677 = vpop.f32.mrf.mxu0
        %v1678 = vadd.f32 %v1546, %v1677
        %v1679 = vpop.f32.mrf.mxu0
        %1680 = vmatprep.mubr.f32.mxu0 0.0
        %1681 = vmatmul.mubr.f32.gmra.mxu0 %v606
        %v1682 = vpop.f32.mrf.mxu0
        %v1683 = vadd.f32 %v1550, %v1682
        %v1684 = vpop.f32.mrf.mxu0
        %1685 = vmatprep.mubr.f32.mxu0 0.0
        %1686 = vmatmul.mubr.f32.gmra.mxu0 %v612
        %v1687 = vpop.f32.mrf.mxu0
        %v1688 = vadd.f32 %v1554, %v1687
        %v1689 = vpop.f32.mrf.mxu0
        %1690 = vmatprep.mubr.f32.mxu0 0.0
        %1691 = vmatmul.mubr.f32.gmra.mxu0 %v618
        %v1692 = vpop.f32.mrf.mxu0
        %v1693 = vadd.f32 %v1558, %v1692
        %v1694 = vpop.f32.mrf.mxu0
        %1695 = vmatprep.mubr.f32.mxu0 0.0
        %1696 = vmatmul.mubr.f32.gmra.mxu0 %v624
        %v1697 = vpop.f32.mrf.mxu0
        %v1698 = vadd.f32 %v1562, %v1697
        %v1699 = vpop.f32.mrf.mxu0
        %1700 = vmatprep.mubr.f32.mxu0 0.0
        %1701 = vmatmul.mubr.f32.gmra.mxu0 %v630
        %v1702 = vpop.f32.mrf.mxu0
        %v1703 = vadd.f32 %v1566, %v1702
        %v1704 = vpop.f32.mrf.mxu0
        %1705 = vmatprep.mubr.f32.mxu0 0.0
        %1706 = vmatmul.mubr.f32.gmra.mxu0 %v636
        %v1707 = vpop.f32.mrf.mxu0
        %v1708 = vadd.f32 %v1570, %v1707
        %v1709 = vpop.f32.mrf.mxu0
        %1710 = vmatprep.mubr.f32.mxu0 0.0
        %1711 = vmatmul.mubr.f32.gmra.mxu0 %v642
        %v1712 = vpop.f32.mrf.mxu0
        %v1713 = vadd.f32 %v1574, %v1712
        %v1714 = vpop.f32.mrf.mxu0
        %1715 = vmatprep.mubr.f32.mxu0 0.0
        %1716 = vmatmul.mubr.f32.gmra.mxu0 %v648
        %v1717 = vpop.f32.mrf.mxu0
        %v1718 = vadd.f32 %v1578, %v1717
        %v1719 = vpop.f32.mrf.mxu0
        %1720 = vmatprep.mubr.f32.mxu0 0.0
        %1721 = vmatmul.mubr.f32.gmra.mxu0 %v654
        %v1722 = vpop.f32.mrf.mxu0
        %v1723 = vadd.f32 %v1582, %v1722
        %v1724 = vpop.f32.mrf.mxu0
        %1725 = vmatprep.mubr.f32.mxu0 0.0
        %1726 = vmatmul.mubr.f32.gmra.mxu0 %v660
        %v1727 = vpop.f32.mrf.mxu0
        %v1728 = vadd.f32 %v1586, %v1727
        %v1729 = vpop.f32.mrf.mxu0
        %1730 = vmatprep.mubr.f32.mxu0 0.0
        %1731 = vmatmul.mubr.f32.gmra.mxu0 %v666
        %v1732 = vpop.f32.mrf.mxu0
        %v1733 = vadd.f32 %v1590, %v1732
        %v1734 = vpop.f32.mrf.mxu0
        %1735 = vmatprep.mubr.f32.mxu0 0.0
        %1736 = vmatmul.mubr.f32.gmra.mxu0 %v672
        %v1737 = vpop.f32.mrf.mxu0
        %v1738 = vadd.f32 %v1594, %v1737
        %v1739 = vpop.f32.mrf.mxu0
        %1740 = vdwg.mxu0
        %v1741 = vlaneseq
        %v1742 = vshrl.u32 %v1741, 7
        %v1743 = vsub.s32 1, %v1742
        %v1744 = vrot.slane %v851, %v1743
        %v1745 = vadd.f32 %v1663, %v1744
        %v1746 = vadd.f32 %v1668, %v1744
        %v1747 = vadd.f32 %v1673, %v1744
        %v1748 = vadd.f32 %v1678, %v1744
        %v1749 = vadd.f32 %v1683, %v1744
        %v1750 = vadd.f32 %v1688, %v1744
        %v1751 = vadd.f32 %v1693, %v1744
        %v1752 = vadd.f32 %v1698, %v1744
        %v1753 = vadd.f32 %v1703, %v1744
        %v1754 = vadd.f32 %v1708, %v1744
        %v1755 = vadd.f32 %v1713, %v1744
        %v1756 = vadd.f32 %v1718, %v1744
        %v1757 = vadd.f32 %v1723, %v1744
        %v1758 = vadd.f32 %v1728, %v1744
        %v1759 = vadd.f32 %v1733, %v1744
        %v1760 = vadd.f32 %v1738, %v1744
        %v1761 = vmul.f32 %v1745, %v956
        %v1762 = vmul.f32 %v1746, %v957
        %v1763 = vmul.f32 %v1747, %v958
        %v1764 = vmul.f32 %v1748, %v959
        %v1765 = vmul.f32 %v1749, %v960
        %v1766 = vmul.f32 %v1750, %v961
        %v1767 = vmul.f32 %v1751, %v962
        %v1768 = vmul.f32 %v1752, %v963
        %v1769 = vmul.f32 %v1753, %v964
        %v1770 = vmul.f32 %v1754, %v965
        %v1771 = vmul.f32 %v1755, %v966
        %v1772 = vmul.f32 %v1756, %v967
        %v1773 = vmul.f32 %v1757, %v968
        %v1774 = vmul.f32 %v1758, %v969
        %v1775 = vmul.f32 %v1759, %v970
        %v1776 = vmul.f32 %v1760, %v971
        %v1777 = vadd.f32 %v1761, %v1223
        %v1778 = vadd.f32 %v1762, %v1224
        %v1779 = vadd.f32 %v1763, %v1225
        %v1780 = vadd.f32 %v1764, %v1226
        %v1781 = vadd.f32 %v1765, %v1227
        %v1782 = vadd.f32 %v1766, %v1228
        %v1783 = vadd.f32 %v1767, %v1229
        %v1784 = vadd.f32 %v1768, %v1230
        %v1785 = vadd.f32 %v1769, %v1231
        %v1786 = vadd.f32 %v1770, %v1232
        %v1787 = vadd.f32 %v1771, %v1233
        %v1788 = vadd.f32 %v1772, %v1234
        %v1789 = vadd.f32 %v1773, %v1235
        %v1790 = vadd.f32 %v1774, %v1236
        %v1791 = vadd.f32 %v1775, %v1237
        %v1792 = vadd.f32 %v1776, %v1238
        %s1793 = scalar_lea.vmem %s376, 128 [#allocation2]
        %1794 = vst [vmem:[%s1793] sm:$0xff] %v1777
        %1795 = vst [vmem:[%s1793 + $0x8] sm:$0xff] %v1778
        %1796 = vst [vmem:[%s1793 + $0x10] sm:$0xff] %v1779
        %1797 = vst [vmem:[%s1793 + $0x18] sm:$0xff] %v1780
        %1798 = vst [vmem:[%s1793 + $0x20] sm:$0xff] %v1781
        %1799 = vst [vmem:[%s1793 + $0x28] sm:$0xff] %v1782
        %1800 = vst [vmem:[%s1793 + $0x30] sm:$0xff] %v1783
        %1801 = vst [vmem:[%s1793 + $0x38] sm:$0xff] %v1784
        %1802 = vst [vmem:[%s1793 + $0x40] sm:$0xff] %v1785
        %1803 = vst [vmem:[%s1793 + $0x48] sm:$0xff] %v1786
        %1804 = vst [vmem:[%s1793 + $0x50] sm:$0xff] %v1787
        %1805 = vst [vmem:[%s1793 + $0x58] sm:$0xff] %v1788
        %1806 = vst [vmem:[%s1793 + $0x60] sm:$0xff] %v1789
        %1807 = vst [vmem:[%s1793 + $0x68] sm:$0xff] %v1790
        %1808 = vst [vmem:[%s1793 + $0x70] sm:$0xff] %v1791
        %1809 = vst [vmem:[%s1793 + $0x78] sm:$0xff] %v1792
        %1810 = vset.pattern.permute.xlu0 2
        %1811 = vperm.xlu0 %1810, %v835
        %v1812 = vpop.permute.xlu0 %1811
        %1814 = vset.pattern.permute.xlu0 2
        %1815 = vperm.xlu0 %1814, %v836
        %v1816 = vpop.permute.xlu0 %1815
        %1818 = vset.pattern.permute.xlu0 2
        %1819 = vperm.xlu0 %1818, %v837
        %v1820 = vpop.permute.xlu0 %1819
        %1822 = vset.pattern.permute.xlu0 2
        %1823 = vperm.xlu0 %1822, %v838
        %v1824 = vpop.permute.xlu0 %1823
        %1826 = vset.pattern.permute.xlu0 2
        %1827 = vperm.xlu0 %1826, %v839
        %v1828 = vpop.permute.xlu0 %1827
        %1830 = vset.pattern.permute.xlu0 2
        %1831 = vperm.xlu0 %1830, %v840
        %v1832 = vpop.permute.xlu0 %1831
        %1834 = vset.pattern.permute.xlu0 2
        %1835 = vperm.xlu0 %1834, %v841
        %v1836 = vpop.permute.xlu0 %1835
        %1838 = vset.pattern.permute.xlu0 2
        %1839 = vperm.xlu0 %1838, %v842
        %v1840 = vpop.permute.xlu0 %1839
        %1842 = vset.pattern.permute.xlu0 2
        %1843 = vperm.xlu0 %1842, %v843
        %v1844 = vpop.permute.xlu0 %1843
        %1846 = vset.pattern.permute.xlu0 2
        %1847 = vperm.xlu0 %1846, %v844
        %v1848 = vpop.permute.xlu0 %1847
        %1850 = vset.pattern.permute.xlu0 2
        %1851 = vperm.xlu0 %1850, %v845
        %v1852 = vpop.permute.xlu0 %1851
        %1854 = vset.pattern.permute.xlu0 2
        %1855 = vperm.xlu0 %1854, %v846
        %v1856 = vpop.permute.xlu0 %1855
        %1858 = vset.pattern.permute.xlu0 2
        %1859 = vperm.xlu0 %1858, %v847
        %v1860 = vpop.permute.xlu0 %1859
        %1862 = vset.pattern.permute.xlu0 2
        %1863 = vperm.xlu0 %1862, %v848
        %v1864 = vpop.permute.xlu0 %1863
        %1866 = vset.pattern.permute.xlu0 2
        %1867 = vperm.xlu0 %1866, %v849
        %v1868 = vpop.permute.xlu0 %1867
        %1870 = vset.pattern.permute.xlu0 2
        %1871 = vperm.xlu0 %1870, %v850
        %v1872 = vpop.permute.xlu0 %1871
        %1874 = vmatprep.subr.mxu0 0.0
        %1875 = vmatpush1.msra.mxu0 %v447
        %1876 = vmatprep.subr.mxu0 0.0
        %1877 = vmatpush1.msra.mxu0 %v446
        %1878 = vmatprep.subr.mxu0 0.0
        %1879 = vmatpush1.msra.mxu0 %v445
        %1880 = vmatprep.subr.mxu0 0.0
        %1881 = vmatpush1.msra.mxu0 %v444
        %1882 = vmatprep.subr.mxu0 0.0
        %1883 = vmatpush1.msra.mxu0 %v443
        %1884 = vmatprep.subr.mxu0 0.0
        %1885 = vmatpush1.msra.mxu0 %v442
        %1886 = vmatprep.subr.mxu0 0.0
        %1887 = vmatpush1.msra.mxu0 %v441
        %1888 = vmatprep.subr.mxu0 0.0
        %1889 = vmatpush1.msra.mxu0 %v440
        %1890 = vmatprep.subr.mxu0 0.0
        %1891 = vmatpush1.msra.mxu0 %v439
        %1892 = vmatprep.subr.mxu0 0.0
        %1893 = vmatpush1.msra.mxu0 %v438
        %1894 = vmatprep.subr.mxu0 0.0
        %1895 = vmatpush1.msra.mxu0 %v437
        %1896 = vmatprep.subr.mxu0 0.0
        %1897 = vmatpush1.msra.mxu0 %v436
        %1898 = vmatprep.subr.mxu0 0.0
        %1899 = vmatpush1.msra.mxu0 %v435
        %1900 = vmatprep.subr.mxu0 0.0
        %1901 = vmatpush1.msra.mxu0 %v434
        %1902 = vmatprep.subr.mxu0 0.0
        %1903 = vmatpush1.msra.mxu0 %v433
        %1904 = vmatprep.subr.mxu0 0.0
        %1905 = vmatpush1.msra.mxu0 %v432
        %1906 = vmatprep.subr.mxu0 0.0
        %1907 = vmatpush2.msra.mxu0 0.0
        %1908 = vmatprep.subr.mxu0 0.0
        %1909 = vmatpush2.msra.mxu0 0.0
        %1910 = vmatprep.subr.mxu0 0.0
        %1911 = vmatpush2.msra.mxu0 0.0
        %1912 = vmatprep.subr.mxu0 0.0
        %1913 = vmatpush2.msra.mxu0 0.0
        %1914 = vmatprep.subr.mxu0 0.0
        %1915 = vmatpush2.msra.mxu0 0.0
        %1916 = vmatprep.subr.mxu0 0.0
        %1917 = vmatpush2.msra.mxu0 0.0
        %1918 = vmatprep.subr.mxu0 0.0
        %1919 = vmatpush2.msra.mxu0 0.0
        %1920 = vmatprep.subr.mxu0 0.0
        %1921 = vmatpush2.msra.mxu0 0.0
        %1922 = vmatprep.subr.mxu0 0.0
        %1923 = vmatpush2.msra.mxu0 0.0
        %1924 = vmatprep.subr.mxu0 0.0
        %1925 = vmatpush2.msra.mxu0 0.0
        %1926 = vmatprep.subr.mxu0 0.0
        %1927 = vmatpush2.msra.mxu0 0.0
        %1928 = vmatprep.subr.mxu0 0.0
        %1929 = vmatpush2.msra.mxu0 0.0
        %1930 = vmatprep.subr.mxu0 0.0
        %1931 = vmatpush2.msra.mxu0 0.0
        %1932 = vmatprep.subr.mxu0 0.0
        %1933 = vmatpush2.msra.mxu0 0.0
        %1934 = vmatprep.subr.mxu0 0.0
        %1935 = vmatpush2.msra.mxu0 0.0
        %1936 = vmatprep.subr.mxu0 0.0
        %1937 = vmatpush2.msra.mxu0 0.0
        %1938 = vmatprep.mubr.f32.mxu0 0.0
        %1939 = vmatmul.mubr.f32.gmra.mxu0 %v741
        %v1940 = vpop.f32.mrf.mxu0
        %v1941 = vadd.f32 %v1812, %v1940
        %v1942 = vpop.f32.mrf.mxu0
        %1943 = vmatprep.mubr.f32.mxu0 0.0
        %1944 = vmatmul.mubr.f32.gmra.mxu0 %v747
        %v1945 = vpop.f32.mrf.mxu0
        %v1946 = vadd.f32 %v1816, %v1945
        %v1947 = vpop.f32.mrf.mxu0
        %1948 = vmatprep.mubr.f32.mxu0 0.0
        %1949 = vmatmul.mubr.f32.gmra.mxu0 %v753
        %v1950 = vpop.f32.mrf.mxu0
        %v1951 = vadd.f32 %v1820, %v1950
        %v1952 = vpop.f32.mrf.mxu0
        %1953 = vmatprep.mubr.f32.mxu0 0.0
        %1954 = vmatmul.mubr.f32.gmra.mxu0 %v759
        %v1955 = vpop.f32.mrf.mxu0
        %v1956 = vadd.f32 %v1824, %v1955
        %v1957 = vpop.f32.mrf.mxu0
        %1958 = vmatprep.mubr.f32.mxu0 0.0
        %1959 = vmatmul.mubr.f32.gmra.mxu0 %v765
        %v1960 = vpop.f32.mrf.mxu0
        %v1961 = vadd.f32 %v1828, %v1960
        %v1962 = vpop.f32.mrf.mxu0
        %1963 = vmatprep.mubr.f32.mxu0 0.0
        %1964 = vmatmul.mubr.f32.gmra.mxu0 %v771
        %v1965 = vpop.f32.mrf.mxu0
        %v1966 = vadd.f32 %v1832, %v1965
        %v1967 = vpop.f32.mrf.mxu0
        %1968 = vmatprep.mubr.f32.mxu0 0.0
        %1969 = vmatmul.mubr.f32.gmra.mxu0 %v777
        %v1970 = vpop.f32.mrf.mxu0
        %v1971 = vadd.f32 %v1836, %v1970
        %v1972 = vpop.f32.mrf.mxu0
        %1973 = vmatprep.mubr.f32.mxu0 0.0
        %1974 = vmatmul.mubr.f32.gmra.mxu0 %v783
        %v1975 = vpop.f32.mrf.mxu0
        %v1976 = vadd.f32 %v1840, %v1975
        %v1977 = vpop.f32.mrf.mxu0
        %1978 = vmatprep.mubr.f32.mxu0 0.0
        %1979 = vmatmul.mubr.f32.gmra.mxu0 %v789
        %v1980 = vpop.f32.mrf.mxu0
        %v1981 = vadd.f32 %v1844, %v1980
        %v1982 = vpop.f32.mrf.mxu0
        %1983 = vmatprep.mubr.f32.mxu0 0.0
        %1984 = vmatmul.mubr.f32.gmra.mxu0 %v795
        %v1985 = vpop.f32.mrf.mxu0
        %v1986 = vadd.f32 %v1848, %v1985
        %v1987 = vpop.f32.mrf.mxu0
        %1988 = vmatprep.mubr.f32.mxu0 0.0
        %1989 = vmatmul.mubr.f32.gmra.mxu0 %v801
        %v1990 = vpop.f32.mrf.mxu0
        %v1991 = vadd.f32 %v1852, %v1990
        %v1992 = vpop.f32.mrf.mxu0
        %1993 = vmatprep.mubr.f32.mxu0 0.0
        %1994 = vmatmul.mubr.f32.gmra.mxu0 %v807
        %v1995 = vpop.f32.mrf.mxu0
        %v1996 = vadd.f32 %v1856, %v1995
        %v1997 = vpop.f32.mrf.mxu0
        %1998 = vmatprep.mubr.f32.mxu0 0.0
        %1999 = vmatmul.mubr.f32.gmra.mxu0 %v813
        %v2000 = vpop.f32.mrf.mxu0
        %v2001 = vadd.f32 %v1860, %v2000
        %v2002 = vpop.f32.mrf.mxu0
        %2003 = vmatprep.mubr.f32.mxu0 0.0
        %2004 = vmatmul.mubr.f32.gmra.mxu0 %v819
        %v2005 = vpop.f32.mrf.mxu0
        %v2006 = vadd.f32 %v1864, %v2005
        %v2007 = vpop.f32.mrf.mxu0
        %2008 = vmatprep.mubr.f32.mxu0 0.0
        %2009 = vmatmul.mubr.f32.gmra.mxu0 %v825
        %v2010 = vpop.f32.mrf.mxu0
        %v2011 = vadd.f32 %v1868, %v2010
        %v2012 = vpop.f32.mrf.mxu0
        %2013 = vmatprep.mubr.f32.mxu0 0.0
        %2014 = vmatmul.mubr.f32.gmra.mxu0 %v831
        %v2015 = vpop.f32.mrf.mxu0
        %v2016 = vadd.f32 %v1872, %v2015
        %v2017 = vpop.f32.mrf.mxu0
        %2018 = vdwg.mxu0
        %v2019 = vlaneseq
        %v2020 = vshrl.u32 %v2019, 7
        %v2021 = vsub.s32 2, %v2020
        %v2022 = vrot.slane %v851, %v2021
        %v2023 = vadd.f32 %v1941, %v2022
        %v2024 = vadd.f32 %v1946, %v2022
        %v2025 = vadd.f32 %v1951, %v2022
        %v2026 = vadd.f32 %v1956, %v2022
        %v2027 = vadd.f32 %v1961, %v2022
        %v2028 = vadd.f32 %v1966, %v2022
        %v2029 = vadd.f32 %v1971, %v2022
        %v2030 = vadd.f32 %v1976, %v2022
        %v2031 = vadd.f32 %v1981, %v2022
        %v2032 = vadd.f32 %v1986, %v2022
        %v2033 = vadd.f32 %v1991, %v2022
        %v2034 = vadd.f32 %v1996, %v2022
        %v2035 = vadd.f32 %v2001, %v2022
        %v2036 = vadd.f32 %v2006, %v2022
        %v2037 = vadd.f32 %v2011, %v2022
        %v2038 = vadd.f32 %v2016, %v2022
        %v2039 = vmul.f32 %v2023, %v956
        %v2040 = vmul.f32 %v2024, %v957
        %v2041 = vmul.f32 %v2025, %v958
        %v2042 = vmul.f32 %v2026, %v959
        %v2043 = vmul.f32 %v2027, %v960
        %v2044 = vmul.f32 %v2028, %v961
        %v2045 = vmul.f32 %v2029, %v962
        %v2046 = vmul.f32 %v2030, %v963
        %v2047 = vmul.f32 %v2031, %v964
        %v2048 = vmul.f32 %v2032, %v965
        %v2049 = vmul.f32 %v2033, %v966
        %v2050 = vmul.f32 %v2034, %v967
        %v2051 = vmul.f32 %v2035, %v968
        %v2052 = vmul.f32 %v2036, %v969
        %v2053 = vmul.f32 %v2037, %v970
        %v2054 = vmul.f32 %v2038, %v971
        %v2055 = vadd.f32 %v2039, %v1223
        %v2056 = vadd.f32 %v2040, %v1224
        %v2057 = vadd.f32 %v2041, %v1225
        %v2058 = vadd.f32 %v2042, %v1226
        %v2059 = vadd.f32 %v2043, %v1227
        %v2060 = vadd.f32 %v2044, %v1228
        %v2061 = vadd.f32 %v2045, %v1229
        %v2062 = vadd.f32 %v2046, %v1230
        %v2063 = vadd.f32 %v2047, %v1231
        %v2064 = vadd.f32 %v2048, %v1232
        %v2065 = vadd.f32 %v2049, %v1233
        %v2066 = vadd.f32 %v2050, %v1234
        %v2067 = vadd.f32 %v2051, %v1235
        %v2068 = vadd.f32 %v2052, %v1236
        %v2069 = vadd.f32 %v2053, %v1237
        %v2070 = vadd.f32 %v2054, %v1238
        %s2071 = scalar_lea.vmem %s376, 256 [#allocation2]
        %2072 = vst [vmem:[%s2071] sm:$0xff] %v2055
        %2073 = vst [vmem:[%s2071 + $0x8] sm:$0xff] %v2056
        %2074 = vst [vmem:[%s2071 + $0x10] sm:$0xff] %v2057
        %2075 = vst [vmem:[%s2071 + $0x18] sm:$0xff] %v2058
        %2076 = vst [vmem:[%s2071 + $0x20] sm:$0xff] %v2059
        %2077 = vst [vmem:[%s2071 + $0x28] sm:$0xff] %v2060
        %2078 = vst [vmem:[%s2071 + $0x30] sm:$0xff] %v2061
        %2079 = vst [vmem:[%s2071 + $0x38] sm:$0xff] %v2062
        %2080 = vst [vmem:[%s2071 + $0x40] sm:$0xff] %v2063
        %2081 = vst [vmem:[%s2071 + $0x48] sm:$0xff] %v2064
        %2082 = vst [vmem:[%s2071 + $0x50] sm:$0xff] %v2065
        %2083 = vst [vmem:[%s2071 + $0x58] sm:$0xff] %v2066
        %2084 = vst [vmem:[%s2071 + $0x60] sm:$0xff] %v2067
        %2085 = vst [vmem:[%s2071 + $0x68] sm:$0xff] %v2068
        %2086 = vst [vmem:[%s2071 + $0x70] sm:$0xff] %v2069
        %2087 = vst [vmem:[%s2071 + $0x78] sm:$0xff] %v2070
        %2088 = vset.pattern.permute.xlu0 3
        %2089 = vperm.xlu0 %2088, %v835
        %v2090 = vpop.permute.xlu0 %2089
        %2092 = vset.pattern.permute.xlu0 3
        %2093 = vperm.xlu0 %2092, %v836
        %v2094 = vpop.permute.xlu0 %2093
        %2096 = vset.pattern.permute.xlu0 3
        %2097 = vperm.xlu0 %2096, %v837
        %v2098 = vpop.permute.xlu0 %2097
        %2100 = vset.pattern.permute.xlu0 3
        %2101 = vperm.xlu0 %2100, %v838
        %v2102 = vpop.permute.xlu0 %2101
        %2104 = vset.pattern.permute.xlu0 3
        %2105 = vperm.xlu0 %2104, %v839
        %v2106 = vpop.permute.xlu0 %2105
        %2108 = vset.pattern.permute.xlu0 3
        %2109 = vperm.xlu0 %2108, %v840
        %v2110 = vpop.permute.xlu0 %2109
        %2112 = vset.pattern.permute.xlu0 3
        %2113 = vperm.xlu0 %2112, %v841
        %v2114 = vpop.permute.xlu0 %2113
        %2116 = vset.pattern.permute.xlu0 3
        %2117 = vperm.xlu0 %2116, %v842
        %v2118 = vpop.permute.xlu0 %2117
        %2120 = vset.pattern.permute.xlu0 3
        %2121 = vperm.xlu0 %2120, %v843
        %v2122 = vpop.permute.xlu0 %2121
        %2124 = vset.pattern.permute.xlu0 3
        %2125 = vperm.xlu0 %2124, %v844
        %v2126 = vpop.permute.xlu0 %2125
        %2128 = vset.pattern.permute.xlu0 3
        %2129 = vperm.xlu0 %2128, %v845
        %v2130 = vpop.permute.xlu0 %2129
        %2132 = vset.pattern.permute.xlu0 3
        %2133 = vperm.xlu0 %2132, %v846
        %v2134 = vpop.permute.xlu0 %2133
        %2136 = vset.pattern.permute.xlu0 3
        %2137 = vperm.xlu0 %2136, %v847
        %v2138 = vpop.permute.xlu0 %2137
        %2140 = vset.pattern.permute.xlu0 3
        %2141 = vperm.xlu0 %2140, %v848
        %v2142 = vpop.permute.xlu0 %2141
        %2144 = vset.pattern.permute.xlu0 3
        %2145 = vperm.xlu0 %2144, %v849
        %v2146 = vpop.permute.xlu0 %2145
        %2148 = vset.pattern.permute.xlu0 3
        %2149 = vperm.xlu0 %2148, %v850
        %v2150 = vpop.permute.xlu0 %2149
        %2152 = vmatprep.subr.mxu0 0.0
        %2153 = vmatpush1.msra.mxu0 %v447
        %2154 = vmatprep.subr.mxu0 0.0
        %2155 = vmatpush1.msra.mxu0 %v446
        %2156 = vmatprep.subr.mxu0 0.0
        %2157 = vmatpush1.msra.mxu0 %v445
        %2158 = vmatprep.subr.mxu0 0.0
        %2159 = vmatpush1.msra.mxu0 %v444
        %2160 = vmatprep.subr.mxu0 0.0
        %2161 = vmatpush1.msra.mxu0 %v443
        %2162 = vmatprep.subr.mxu0 0.0
        %2163 = vmatpush1.msra.mxu0 %v442
        %2164 = vmatprep.subr.mxu0 0.0
        %2165 = vmatpush1.msra.mxu0 %v441
        %2166 = vmatprep.subr.mxu0 0.0
        %2167 = vmatpush1.msra.mxu0 %v440
        %2168 = vmatprep.subr.mxu0 0.0
        %2169 = vmatpush1.msra.mxu0 %v439
        %2170 = vmatprep.subr.mxu0 0.0
        %2171 = vmatpush1.msra.mxu0 %v438
        %2172 = vmatprep.subr.mxu0 0.0
        %2173 = vmatpush1.msra.mxu0 %v437
        %2174 = vmatprep.subr.mxu0 0.0
        %2175 = vmatpush1.msra.mxu0 %v436
        %2176 = vmatprep.subr.mxu0 0.0
        %2177 = vmatpush1.msra.mxu0 %v435
        %2178 = vmatprep.subr.mxu0 0.0
        %2179 = vmatpush1.msra.mxu0 %v434
        %2180 = vmatprep.subr.mxu0 0.0
        %2181 = vmatpush1.msra.mxu0 %v433
        %2182 = vmatprep.subr.mxu0 0.0
        %2183 = vmatpush1.msra.mxu0 %v432
        %2184 = vmatprep.subr.mxu0 0.0
        %2185 = vmatpush2.msra.mxu0 0.0
        %2186 = vmatprep.subr.mxu0 0.0
        %2187 = vmatpush2.msra.mxu0 0.0
        %2188 = vmatprep.subr.mxu0 0.0
        %2189 = vmatpush2.msra.mxu0 0.0
        %2190 = vmatprep.subr.mxu0 0.0
        %2191 = vmatpush2.msra.mxu0 0.0
        %2192 = vmatprep.subr.mxu0 0.0
        %2193 = vmatpush2.msra.mxu0 0.0
        %2194 = vmatprep.subr.mxu0 0.0
        %2195 = vmatpush2.msra.mxu0 0.0
        %2196 = vmatprep.subr.mxu0 0.0
        %2197 = vmatpush2.msra.mxu0 0.0
        %2198 = vmatprep.subr.mxu0 0.0
        %2199 = vmatpush2.msra.mxu0 0.0
        %2200 = vmatprep.subr.mxu0 0.0
        %2201 = vmatpush2.msra.mxu0 0.0
        %2202 = vmatprep.subr.mxu0 0.0
        %2203 = vmatpush2.msra.mxu0 0.0
        %2204 = vmatprep.subr.mxu0 0.0
        %2205 = vmatpush2.msra.mxu0 0.0
        %2206 = vmatprep.subr.mxu0 0.0
        %2207 = vmatpush2.msra.mxu0 0.0
        %2208 = vmatprep.subr.mxu0 0.0
        %2209 = vmatpush2.msra.mxu0 0.0
        %2210 = vmatprep.subr.mxu0 0.0
        %2211 = vmatpush2.msra.mxu0 0.0
        %2212 = vmatprep.subr.mxu0 0.0
        %2213 = vmatpush2.msra.mxu0 0.0
        %2214 = vmatprep.subr.mxu0 0.0
        %2215 = vmatpush2.msra.mxu0 0.0
        %2216 = vmatprep.mubr.f32.mxu0 0.0
        %2217 = vmatmul.mubr.f32.gmra.mxu0 %v743
        %v2218 = vpop.f32.mrf.mxu0
        %v2219 = vadd.f32 %v2090, %v2218
        %v2220 = vpop.f32.mrf.mxu0
        %2221 = vmatprep.mubr.f32.mxu0 0.0
        %2222 = vmatmul.mubr.f32.gmra.mxu0 %v749
        %v2223 = vpop.f32.mrf.mxu0
        %v2224 = vadd.f32 %v2094, %v2223
        %v2225 = vpop.f32.mrf.mxu0
        %2226 = vmatprep.mubr.f32.mxu0 0.0
        %2227 = vmatmul.mubr.f32.gmra.mxu0 %v755
        %v2228 = vpop.f32.mrf.mxu0
        %v2229 = vadd.f32 %v2098, %v2228
        %v2230 = vpop.f32.mrf.mxu0
        %2231 = vmatprep.mubr.f32.mxu0 0.0
        %2232 = vmatmul.mubr.f32.gmra.mxu0 %v761
        %v2233 = vpop.f32.mrf.mxu0
        %v2234 = vadd.f32 %v2102, %v2233
        %v2235 = vpop.f32.mrf.mxu0
        %2236 = vmatprep.mubr.f32.mxu0 0.0
        %2237 = vmatmul.mubr.f32.gmra.mxu0 %v767
        %v2238 = vpop.f32.mrf.mxu0
        %v2239 = vadd.f32 %v2106, %v2238
        %v2240 = vpop.f32.mrf.mxu0
        %2241 = vmatprep.mubr.f32.mxu0 0.0
        %2242 = vmatmul.mubr.f32.gmra.mxu0 %v773
        %v2243 = vpop.f32.mrf.mxu0
        %v2244 = vadd.f32 %v2110, %v2243
        %v2245 = vpop.f32.mrf.mxu0
        %2246 = vmatprep.mubr.f32.mxu0 0.0
        %2247 = vmatmul.mubr.f32.gmra.mxu0 %v779
        %v2248 = vpop.f32.mrf.mxu0
        %v2249 = vadd.f32 %v2114, %v2248
        %v2250 = vpop.f32.mrf.mxu0
        %2251 = vmatprep.mubr.f32.mxu0 0.0
        %2252 = vmatmul.mubr.f32.gmra.mxu0 %v785
        %v2253 = vpop.f32.mrf.mxu0
        %v2254 = vadd.f32 %v2118, %v2253
        %v2255 = vpop.f32.mrf.mxu0
        %2256 = vmatprep.mubr.f32.mxu0 0.0
        %2257 = vmatmul.mubr.f32.gmra.mxu0 %v791
        %v2258 = vpop.f32.mrf.mxu0
        %v2259 = vadd.f32 %v2122, %v2258
        %v2260 = vpop.f32.mrf.mxu0
        %2261 = vmatprep.mubr.f32.mxu0 0.0
        %2262 = vmatmul.mubr.f32.gmra.mxu0 %v797
        %v2263 = vpop.f32.mrf.mxu0
        %v2264 = vadd.f32 %v2126, %v2263
        %v2265 = vpop.f32.mrf.mxu0
        %2266 = vmatprep.mubr.f32.mxu0 0.0
        %2267 = vmatmul.mubr.f32.gmra.mxu0 %v803
        %v2268 = vpop.f32.mrf.mxu0
        %v2269 = vadd.f32 %v2130, %v2268
        %v2270 = vpop.f32.mrf.mxu0
        %2271 = vmatprep.mubr.f32.mxu0 0.0
        %2272 = vmatmul.mubr.f32.gmra.mxu0 %v809
        %v2273 = vpop.f32.mrf.mxu0
        %v2274 = vadd.f32 %v2134, %v2273
        %v2275 = vpop.f32.mrf.mxu0
        %2276 = vmatprep.mubr.f32.mxu0 0.0
        %2277 = vmatmul.mubr.f32.gmra.mxu0 %v815
        %v2278 = vpop.f32.mrf.mxu0
        %v2279 = vadd.f32 %v2138, %v2278
        %v2280 = vpop.f32.mrf.mxu0
        %2281 = vmatprep.mubr.f32.mxu0 0.0
        %2282 = vmatmul.mubr.f32.gmra.mxu0 %v821
        %v2283 = vpop.f32.mrf.mxu0
        %v2284 = vadd.f32 %v2142, %v2283
        %v2285 = vpop.f32.mrf.mxu0
        %2286 = vmatprep.mubr.f32.mxu0 0.0
        %2287 = vmatmul.mubr.f32.gmra.mxu0 %v827
        %v2288 = vpop.f32.mrf.mxu0
        %v2289 = vadd.f32 %v2146, %v2288
        %v2290 = vpop.f32.mrf.mxu0
        %2291 = vmatprep.mubr.f32.mxu0 0.0
        %2292 = vmatmul.mubr.f32.gmra.mxu0 %v833
        %v2293 = vpop.f32.mrf.mxu0
        %v2294 = vadd.f32 %v2150, %v2293
        %v2295 = vpop.f32.mrf.mxu0
        %2296 = vdwg.mxu0
        %v2297 = vlaneseq
        %v2298 = vshrl.u32 %v2297, 7
        %v2299 = vsub.s32 3, %v2298
        %v2300 = vrot.slane %v851, %v2299
        %v2301 = vadd.f32 %v2219, %v2300
        %v2302 = vadd.f32 %v2224, %v2300
        %v2303 = vadd.f32 %v2229, %v2300
        %v2304 = vadd.f32 %v2234, %v2300
        %v2305 = vadd.f32 %v2239, %v2300
        %v2306 = vadd.f32 %v2244, %v2300
        %v2307 = vadd.f32 %v2249, %v2300
        %v2308 = vadd.f32 %v2254, %v2300
        %v2309 = vadd.f32 %v2259, %v2300
        %v2310 = vadd.f32 %v2264, %v2300
        %v2311 = vadd.f32 %v2269, %v2300
        %v2312 = vadd.f32 %v2274, %v2300
        %v2313 = vadd.f32 %v2279, %v2300
        %v2314 = vadd.f32 %v2284, %v2300
        %v2315 = vadd.f32 %v2289, %v2300
        %v2316 = vadd.f32 %v2294, %v2300
        %v2317 = vmul.f32 %v2301, %v956
        %v2318 = vmul.f32 %v2302, %v957
        %v2319 = vmul.f32 %v2303, %v958
        %v2320 = vmul.f32 %v2304, %v959
        %v2321 = vmul.f32 %v2305, %v960
        %v2322 = vmul.f32 %v2306, %v961
        %v2323 = vmul.f32 %v2307, %v962
        %v2324 = vmul.f32 %v2308, %v963
        %v2325 = vmul.f32 %v2309, %v964
        %v2326 = vmul.f32 %v2310, %v965
        %v2327 = vmul.f32 %v2311, %v966
        %v2328 = vmul.f32 %v2312, %v967
        %v2329 = vmul.f32 %v2313, %v968
        %v2330 = vmul.f32 %v2314, %v969
        %v2331 = vmul.f32 %v2315, %v970
        %v2332 = vmul.f32 %v2316, %v971
        %v2333 = vadd.f32 %v2317, %v1223
        %v2334 = vadd.f32 %v2318, %v1224
        %v2335 = vadd.f32 %v2319, %v1225
        %v2336 = vadd.f32 %v2320, %v1226
        %v2337 = vadd.f32 %v2321, %v1227
        %v2338 = vadd.f32 %v2322, %v1228
        %v2339 = vadd.f32 %v2323, %v1229
        %v2340 = vadd.f32 %v2324, %v1230
        %v2341 = vadd.f32 %v2325, %v1231
        %v2342 = vadd.f32 %v2326, %v1232
        %v2343 = vadd.f32 %v2327, %v1233
        %v2344 = vadd.f32 %v2328, %v1234
        %v2345 = vadd.f32 %v2329, %v1235
        %v2346 = vadd.f32 %v2330, %v1236
        %v2347 = vadd.f32 %v2331, %v1237
        %v2348 = vadd.f32 %v2332, %v1238
        %s2349 = scalar_lea.vmem %s376, 384 [#allocation2]
        %2350 = vst [vmem:[%s2349] sm:$0xff] %v2333
        %2351 = vst [vmem:[%s2349 + $0x8] sm:$0xff] %v2334
        %2352 = vst [vmem:[%s2349 + $0x10] sm:$0xff] %v2335
        %2353 = vst [vmem:[%s2349 + $0x18] sm:$0xff] %v2336
        %2354 = vst [vmem:[%s2349 + $0x20] sm:$0xff] %v2337
        %2355 = vst [vmem:[%s2349 + $0x28] sm:$0xff] %v2338
        %2356 = vst [vmem:[%s2349 + $0x30] sm:$0xff] %v2339
        %2357 = vst [vmem:[%s2349 + $0x38] sm:$0xff] %v2340
        %2358 = vst [vmem:[%s2349 + $0x40] sm:$0xff] %v2341
        %2359 = vst [vmem:[%s2349 + $0x48] sm:$0xff] %v2342
        %2360 = vst [vmem:[%s2349 + $0x50] sm:$0xff] %v2343
        %2361 = vst [vmem:[%s2349 + $0x58] sm:$0xff] %v2344
        %2362 = vst [vmem:[%s2349 + $0x60] sm:$0xff] %v2345
        %2363 = vst [vmem:[%s2349 + $0x68] sm:$0xff] %v2346
        %2364 = vst [vmem:[%s2349 + $0x70] sm:$0xff] %v2347
        %2365 = vst [vmem:[%s2349 + $0x78] sm:$0xff] %v2348
        %s2366 = sand.u32 %s224, 1
        %s2367 = scalar_lea.sflag [#allocation3], %s2366
        %s2368 = sand.u32 %s224, 1
        %s2369 = smul.addr %s2368, 512
        %s2370 = scalar_lea.vmem [#allocation2], %s2369
        // Predicated region
        $region49: #{tpu_custom_call.1} parent=47 // pred_check
          %p2371 = pneg %p234
        $region50: #{tpu_custom_call.1} parent=47 // pred_check_branch
          %2373 = sbr.rel (%p2371) target = $region52
        $region51: #{tpu_custom_call.1} parent=47 // pred_region
          %s2374 = smul.u32 16, %s26
          %s2376 = ssub.s32 8192, 8192
          %2377 = vsyncadd %s2367, %s2376
          %s2378 = smul.addr %s25, 64
          %s2379 = sadd.s32 %s2374, %s2378
          %s2380 = smul.addr %s2379, 128
          %s2381 = scalar_lea.hbm %s7, %s2380
          %s2382 = sshll.u32 %s2370, 4
          %s2383 = int_to_ptr.vmem [resolvable:$true] %s2382
          %2388 = dma.vmem_to_hbm [thread:$0]  %s2383, 8192, %s2381, %s2367, 128, 128, 8
        $region52: #{tpu_custom_call.1} parent=47 // pred_fallthru
          _
      $region48: #{tpu_custom_call.1} parent=5 // pred_fallthru
        _
      %p2389 = scmp.le.s32.totalorder 2, %s16
      // Predicated region
      $region53: #{tpu_custom_call.1} parent=5 // pred_check
        %p2390 = pneg %p2389
      $region54: #{tpu_custom_call.1} parent=5 // pred_check_branch
        %2392 = sbr.rel (%p2390) target = $region56
      $region55: #{tpu_custom_call.1} parent=5 // pred_region
        %s2393 = ssub.s32 %s16, 2
        // Predicated region
        $region57: #{tpu_custom_call.1} parent=55 // pred_check
          %p2394 = pneg %p240
        $region58: #{tpu_custom_call.1} parent=55 // pred_check_branch
          %2396 = sbr.rel (%p2394) target = $region60
        $region59: #{tpu_custom_call.1} parent=55 // pred_region
          %s2397 = sand.u32 %s225, 1
          %s2398 = scalar_lea.sflag [#allocation3], %s2397
          %s2399 = sand.u32 %s225, 1
          %s2400 = smul.addr %s2399, 512
          %s2401 = scalar_lea.vmem [#allocation2], %s2400
          %2402 = dma.done %s2398, 8192
        $region60: #{tpu_custom_call.1} parent=55 // pred_fallthru
          _
      $region56: #{tpu_custom_call.1} parent=5 // pred_fallthru
        _
    $region6: #{tpu_custom_call.1} parent=1 // loop_footer
      %s20 = sadd.s32 1, %s16
    $region7: #{tpu_custom_call.1} parent=1 // loop_footer_branch
      %15 = sbr.rel target = $region3
    $region8: #{tpu_custom_call.1} parent=1 // loop_exit
      _
    %2403 = vsyncpa [#allocation3], 1
    %s2404 = scalar_lea.sflag [#allocation3], 1
    %2405 = vsyncpa %s2404, 1

</llo_original>
